<compile_context>
chip_gen: v6e
topology: v6e:2x2x1
jax: 0.10.0
libtpu: 0.0.40
codegen_flags: <defaults>
</compile_context>

<pallas_src>
import functools
import math

import jax
import jax.numpy as jnp
from jax.experimental import pallas as pl
from jax.experimental.pallas import tpu as pltpu

_BN_EPS = 1e-5
_LANE = 128
_MATMUL_PRECISION = None  # jax.lax.Precision.HIGHEST for strict f32 parity


def _round_up(x, m):
    return -(-x // m) * m


def _vmem():
    return pl.BlockSpec(memory_space=pltpu.MemorySpace.VMEM)


# ---------------------------------------------------------------------------
# In-kernel helpers (operate on VMEM values; all shapes are static).
# ---------------------------------------------------------------------------
def _fold_channels(v, wo, cout):
    # (1, Wo*Cout) -> (1, Cout): exact f32 sum over the Wo lane groups.
    acc = v[:, 0:cout]
    for i in range(1, wo):
        acc = acc + v[:, i * cout:(i + 1) * cout]
    return acc


def _bcast_channels(v, wo):
    # (1, Cout) -> (1, Wo*Cout): repeat per-channel values across lane groups.
    return jnp.concatenate([v] * wo, axis=1)


def _conv_bn_relu_pool(a, t, gamma_lane, beta_lane, *, kh, ho, wo, cout, pool,
                       n_real):
    """a: (H, Npad, W*Cin) -> (H', Npad, W'*Cout); batch-stat BN + ReLU (+ pool)."""
    npad = a.shape[1]
    lanes = wo * cout

    # Merge the kh row-shifted slabs into the contraction dim: one MXU matmul
    # with batch-stacked M = Ho*Npad, K = kh*W*Cin, N = Wo*Cout.
    xs = jnp.concatenate([a[ky:ky + ho] for ky in range(kh)], axis=2)
    xm = xs.reshape(ho * npad, kh * a.shape[2])          # tile-aligned (Npad % 8 == 0)
    y = jnp.dot(xm, t, precision=_MATMUL_PRECISION,
                preferred_element_type=jnp.float32)      # (Ho*Npad, Wo*Cout)
    y3 = y.reshape(ho, npad, lanes)

    # BatchNorm2d, training mode (batch statistics, biased variance).  Padded
    # batch rows are exactly zero pre-BN (no conv bias), so plain sums give the
    # correct mean; the variance uses masked, exactly-centered f32 sums.
    count = float(n_real * ho * wo)
    mask = (jax.lax.broadcasted_iota(jnp.int32, (1, npad, 1), 1)
            < n_real).astype(jnp.float32)
    lane_sum = jnp.sum(jnp.sum(y3, axis=0), axis=0, keepdims=True)
    mean_lane = _bcast_channels(_fold_channels(lane_sum, wo, cout) / count, wo)
    ctr = y3 - mean_lane
    ctrm = ctr * mask
    sq_sum = jnp.sum(jnp.sum(ctrm * ctrm, axis=0), axis=0, keepdims=True)
    var_lane = _bcast_channels(_fold_channels(sq_sum, wo, cout) / count, wo)
    scale = gamma_lane * jax.lax.rsqrt(var_lane + _BN_EPS)
    z = jnp.maximum(ctr * scale + beta_lane, 0.0) * mask  # re-zero padded rows

    if not pool:
        return z

    # Fused 2x2 max-pool on the VPU (pairwise max + concat; no selection matmuls).
    hp, wp = ho // 2, wo // 2
    rows = [jnp.maximum(z[2 * i:2 * i + 1], z[2 * i + 1:2 * i + 2])
            for i in range(hp)]
    r = jnp.concatenate(rows, axis=0)                     # (Hp, Npad, Wo*Cout)
    cols = [jnp.maximum(r[:, :, (2 * j) * cout:(2 * j + 1) * cout],
                        r[:, :, (2 * j + 1) * cout:(2 * j + 2) * cout])
            for j in range(wp)]
    return jnp.concatenate(cols, axis=2)                  # (Hp, Npad, Wp*Cout)


def _make_fused_kernel(conv_specs, n_real):
    n_conv = len(conv_specs)

    def kernel(*refs):
        x_ref = refs[0]
        o_ref = refs[-1]
        a = x_ref[...]                                    # (H, Npad, W*Cin)
        npad = a.shape[1]

        for li, (kh, ho, wo, cout, pool) in enumerate(conv_specs):
            t_ref, g_ref, b_ref = refs[1 + 3 * li:4 + 3 * li]
            a = _conv_bn_relu_pool(a, t_ref[...], g_ref[...], b_ref[...],
                                   kh=kh, ho=ho, wo=wo, cout=cout, pool=pool,
                                   n_real=n_real)

        w1_ref, gf_ref, bf_ref, wh_ref, bh_ref = refs[1 + 3 * n_conv:6 + 3 * n_conv]

        # fc1 as per-image-row weight slabs (avoids a lane-mixing flatten reshape).
        h3 = a.shape[0]
        y1 = jnp.dot(a[0], w1_ref[0], precision=_MATMUL_PRECISION,
                     preferred_element_type=jnp.float32)
        for h in range(1, h3):
            y1 = y1 + jnp.dot(a[h], w1_ref[h], precision=_MATMUL_PRECISION,
                              preferred_element_type=jnp.float32)

        # BatchNorm1d (batch statistics, centered variance) + ReLU.
        mask_n = (jax.lax.broadcasted_iota(jnp.int32, (npad, 1), 0)
                  < n_real).astype(jnp.float32)
        mean = jnp.sum(y1 * mask_n, axis=0, keepdims=True) / float(n_real)
        ctr = y1 - mean
        ctrm = ctr * mask_n
        var = jnp.sum(ctrm * ctrm, axis=0, keepdims=True) / float(n_real)
        hdn = jnp.maximum(ctr * jax.lax.rsqrt(var + _BN_EPS) * gf_ref[...]
                          + bf_ref[...], 0.0)

        # Four heads fused into one lane-dense matmul; sigmoid on lane 0 (out_d).
        out = jnp.dot(hdn, wh_ref[...], precision=_MATMUL_PRECISION,
                      preferred_element_type=jnp.float32) + bh_ref[...]
        lane = jax.lax.broadcasted_iota(jnp.int32, out.shape, 1)
        o_ref[...] = jnp.where(lane == 0, 1.0 / (1.0 + jnp.exp(-out)), out)

    return kernel


# ---------------------------------------------------------------------------
# Wrapper-side weight preparation (tiny, weight-sized glue, plain XLA).
# ---------------------------------------------------------------------------
def _build_toeplitz(w_pt, w_in, wo):
    """PyTorch conv weight (Cout, Cin, kh, kw) -> merged (kh*W*Cin, Wo*Cout)."""
    c_out, c_in, kh, kw = w_pt.shape
    w_pt = w_pt.astype(jnp.float32)
    slabs = []
    for ky in range(kh):
        t = jnp.zeros((w_in * c_in, wo * c_out), jnp.float32)
        for kx in range(kw):
            d = jnp.eye(w_in, wo, k=-kx, dtype=jnp.float32)  # d[w, wo]=1 iff w==wo+kx
            t = t + jnp.kron(d, w_pt[:, :, ky, kx].T)
        slabs.append(t)
    return jnp.concatenate(slabs, axis=0)


def infodiscriminator_forward(x_nchw, params, dataset="MNIST"):
    n, c_in, hh, ww = x_nchw.shape
    npad = _round_up(max(n, 1), 8)

    # NCHW -> (H, Npad, W*C): image rows outer, zero-padded batch on sublanes,
    # lane-packed W*C.  Every kernel reshape is then tile-aligned.
    x = jnp.transpose(x_nchw.astype(jnp.float32), (2, 0, 3, 1)).reshape(hh, n, ww * c_in)
    x = jnp.pad(x, ((0, 0), (0, npad - n), (0, 0)))

    layer_defs = [("conv1_w", "cbn1_g", "cbn1_b", True)]
    if dataset == "CelebA":
        layer_defs.append(("conv2_w", "cbn2_g", "cbn2_b", True))
    layer_defs.append(("conv3_w", "cbn3_g", "cbn3_b", False))

    conv_specs, conv_args = [], []
    cur_h, cur_w, cur_c = hh, ww, c_in
    for (wname, gname, bname, pool) in layer_defs:
        w_pt = params[wname]
        c_out, _, kh, kw = w_pt.shape
        ho, wo = cur_h - kh + 1, cur_w - kw + 1
        t = _build_toeplitz(w_pt, cur_w, wo)
        g_lane = jnp.tile(params[gname].astype(jnp.float32), (wo,)).reshape(1, wo * c_out)
        b_lane = jnp.tile(params[bname].astype(jnp.float32), (wo,)).reshape(1, wo * c_out)
        conv_specs.append((kh, ho, wo, c_out, pool))
        conv_args += [t, g_lane, b_lane]
        cur_h, cur_w = (ho // 2, wo // 2) if pool else (ho, wo)
        cur_c = c_out
    h3, w3, c3 = cur_h, cur_w, cur_c

    hidden = params["fc1_w"].shape[1]
    hpad = _round_up(hidden, _LANE)

    # fc1 rows permuted from PyTorch's NCHW-flat order to our (h, w, c) order,
    # zero-padded to a lane-dense hidden dim, split into per-image-row slabs.
    hh_i, ww_i, cc_i = jnp.meshgrid(jnp.arange(h3), jnp.arange(w3),
                                    jnp.arange(c3), indexing="ij")
    perm = (cc_i * (h3 * w3) + hh_i * w3 + ww_i).reshape(-1)
    w1 = params["fc1_w"].astype(jnp.float32)[perm, :]
    w1 = jnp.pad(w1, ((0, 0), (0, hpad - hidden))).reshape(h3, w3 * c3, hpad)
    gf = jnp.pad(params["bn1_g"].astype(jnp.float32).reshape(1, -1),
                 ((0, 0), (0, hpad - hidden)))
    bf = jnp.pad(params["bn1_b"].astype(jnp.float32).reshape(1, -1),
                 ((0, 0), (0, hpad - hidden)))
    # conv / fc1 biases omitted: batch-statistic BatchNorm cancels them exactly.

    # Heads fused into one lane-dense matmul: [d | q_cat | q_mean | q_logvar].
    cat = params["out_q_cat_w"].shape[1]
    ncat = params["out_q_mean_w"].shape[1]
    wh = jnp.concatenate([params["out_d_w"], params["out_q_cat_w"],
                          params["out_q_mean_w"], params["out_q_logvar_w"]],
                         axis=1).astype(jnp.float32)
    bh = jnp.concatenate([params["out_d_b"], params["out_q_cat_b"],
                          params["out_q_mean_b"], params["out_q_logvar_b"]],
                         axis=1).astype(jnp.float32)
    n_out = wh.shape[1]
    opad = _round_up(n_out, _LANE)
    wh = jnp.pad(wh, ((0, hpad - hidden), (0, opad - n_out)))
    bh = jnp.pad(bh, ((0, 0), (0, opad - n_out)))

    args = [x] + conv_args + [w1, gf, bf, wh, bh]
    kernel = _make_fused_kernel(tuple(conv_specs), n)
    out = pl.pallas_call(
        kernel,
        out_shape=jax.ShapeDtypeStruct((npad, opad), jnp.float32),
        in_specs=[_vmem() for _ in args],
        out_specs=_vmem(),
        compiler_params=pltpu.CompilerParams(
            # Whole (padded) batch + weights resident in VMEM; comfortably
            # within v7x's 64 MiB physical VMEM for these model sizes.
            vmem_limit_bytes=32 * 1024 * 1024),
    )(*args)

    d = out[:n, 0:1]                                      # sigmoid'd in-kernel
    q_cat = out[:n, 1:1 + cat]
    q_mean = out[:n, 1 + cat:1 + cat + ncat]
    q_logvar = out[:n, 1 + cat + ncat:1 + cat + 2 * ncat]
    return d, q_cat, q_mean, q_logvar


# ---------------------------------------------------------------------------
# Deterministic parameter init (shapes follow the PyTorch __init__).
# Linear weights are stored as (in_features, out_features).
# Conv/fc1 biases are kept for parity but unused: batch-stat BN cancels them.
# ---------------------------------------------------------------------------
def init_params(key, input_channels, categorical_features,
                non_categorical_features, after_conv_size):
    h, w = after_conv_size
    flat = 16 * h * w
    hidden = int(math.sqrt(flat))
    ks = jax.random.split(key, 20)

    def rn(k, shape, scale=0.1):
        return (scale * jax.random.normal(k, shape)).astype(jnp.float32)

    return {
        "conv1_w": rn(ks[0], (8, input_channels, 3, 3)),
        "conv1_b": rn(ks[1], (8,)),                      # unused (BN cancels)
        "cbn1_g": jnp.ones((8,), jnp.float32),
        "cbn1_b": jnp.zeros((8,), jnp.float32),
        "conv2_w": rn(ks[14], (8, 8, 3, 3)),             # CelebA path
        "conv2_b": rn(ks[15], (8,)),                     # unused (BN cancels)
        "cbn2_g": jnp.ones((8,), jnp.float32),
        "cbn2_b": jnp.zeros((8,), jnp.float32),
        "conv3_w": rn(ks[2], (16, 8, 3, 3)),
        "conv3_b": rn(ks[3], (16,)),                     # unused (BN cancels)
        "cbn3_g": jnp.ones((16,), jnp.float32),
        "cbn3_b": jnp.zeros((16,), jnp.float32),
        "fc1_w": rn(ks[4], (flat, hidden)),
        "fc1_b": rn(ks[5], (hidden,)),                   # unused (BN cancels)
        "bn1_g": jnp.ones((hidden,), jnp.float32),
        "bn1_b": jnp.zeros((hidden,), jnp.float32),
        "out_d_w": rn(ks[6], (hidden, 1)),
        "out_d_b": rn(ks[7], (1, 1)),
        "out_q_cat_w": rn(ks[8], (hidden, categorical_features)),
        "out_q_cat_b": rn(ks[9], (1, categorical_features)),
        "out_q_mean_w": rn(ks[10], (hidden, non_categorical_features)),
        "out_q_mean_b": rn(ks[11], (1, non_categorical_features)),
        "out_q_logvar_w": rn(ks[12], (hidden, non_categorical_features)),
        "out_q_logvar_b": rn(ks[13], (1, non_categorical_features)),
    }


if __name__ == "__main__":
    key = jax.random.PRNGKey(0)
    k_x, k_p, k_x2, k_p2 = jax.random.split(key, 4)

    categorical_features, non_categorical_features = 10, 2

    # MNIST-like config: 2x1x16x16 -> conv1 -> 14 -> pool -> 7 -> conv3 -> 5
    N, C, H, W = 2, 1, 16, 16
    x = jax.random.normal(k_x, (N, C, H, W), jnp.float32)
    params = init_params(k_p, C, categorical_features,
                         non_categorical_features, (5, 5))
    fwd = jax.jit(functools.partial(infodiscriminator_forward, dataset="MNIST"))
    d, q_cat, q_mean, q_logvar = fwd(x, params)
    jax.block_until_ready((d, q_cat, q_mean, q_logvar))
    assert d.shape == (N, 1)
    assert q_cat.shape == (N, categorical_features)
    assert q_mean.shape == (N, non_categorical_features)
    assert q_logvar.shape == (N, non_categorical_features)
    assert bool(jnp.all(jnp.isfinite(
        jnp.concatenate([d, q_cat, q_mean, q_logvar], axis=1))))
    assert bool(jnp.all((d >= 0.0) & (d <= 1.0)))

    # CelebA path (exercises conv2): 2x3x22x22 -> 20 -> 10 -> 8 -> 4 -> 2
    N2, C2, H2, W2 = 2, 3, 22, 22
    x2 = jax.random.normal(k_x2, (N2, C2, H2, W2), jnp.float32)
    params2 = init_params(k_p2, C2, categorical_features,
                          non_categorical_features, (2, 2))
    fwd2 = jax.jit(functools.partial(infodiscriminator_forward, dataset="CelebA"))
    d2, qc2, qm2, qv2 = fwd2(x2, params2)
    jax.block_until_ready((d2, qc2, qm2, qv2))
    assert d2.shape == (N2, 1) and qc2.shape == (N2, categorical_features)
    assert qm2.shape == (N2, non_categorical_features)
    assert qv2.shape == (N2, non_categorical_features)
    assert bool(jnp.all(jnp.isfinite(
        jnp.concatenate([d2, qc2, qm2, qv2], axis=1))))
    assert bool(jnp.all((d2 >= 0.0) & (d2 <= 1.0)))

    print("KERNEL_OK")
</pallas_src>

<mosaic_0001>
module attributes {stable_mosaic.version = 11 : i64} {
  func.func @kernel(%arg0: memref<16x8x16xf32, #tpu.memory_space<vmem>>, %arg1: memref<48x112xf32, #tpu.memory_space<vmem>>, %arg2: memref<1x112xf32, #tpu.memory_space<vmem>>, %arg3: memref<1x112xf32, #tpu.memory_space<vmem>>, %arg4: memref<168x80xf32, #tpu.memory_space<vmem>>, %arg5: memref<1x80xf32, #tpu.memory_space<vmem>>, %arg6: memref<1x80xf32, #tpu.memory_space<vmem>>, %arg7: memref<5x80x128xf32, #tpu.memory_space<vmem>>, %arg8: memref<1x128xf32, #tpu.memory_space<vmem>>, %arg9: memref<1x128xf32, #tpu.memory_space<vmem>>, %arg10: memref<128x128xf32, #tpu.memory_space<vmem>>, %arg11: memref<1x128xf32, #tpu.memory_space<vmem>>, %arg12: memref<8x128xf32, #tpu.memory_space<vmem>>) attributes {dimension_semantics = [], scalar_prefetch = 0 : i64, scratch_operands = 0 : i64, tpu.core_type = #tpu.core_type<tc>} {
    %c0 = arith.constant 0 : index
    %c0_0 = arith.constant 0 : index
    %c0_1 = arith.constant 0 : index
    %0 = vector.load %arg0[%c0, %c0_0, %c0_1] : memref<16x8x16xf32, #tpu.memory_space<vmem>>, vector<16x8x16xf32>
    %c0_2 = arith.constant 0 : index
    %c0_3 = arith.constant 0 : index
    %1 = vector.load %arg1[%c0_2, %c0_3] : memref<48x112xf32, #tpu.memory_space<vmem>>, vector<48x112xf32>
    %c0_4 = arith.constant 0 : index
    %c0_5 = arith.constant 0 : index
    %2 = vector.load %arg2[%c0_4, %c0_5] : memref<1x112xf32, #tpu.memory_space<vmem>>, vector<1x112xf32>
    %c0_6 = arith.constant 0 : index
    %c0_7 = arith.constant 0 : index
    %3 = vector.load %arg3[%c0_6, %c0_7] : memref<1x112xf32, #tpu.memory_space<vmem>>, vector<1x112xf32>
    %4 = vector.extract_strided_slice %0 {offsets = [0, 0, 0], sizes = [14, 8, 16], strides = [1, 1, 1]} : vector<16x8x16xf32> to vector<14x8x16xf32>
    %5 = vector.extract_strided_slice %0 {offsets = [1, 0, 0], sizes = [14, 8, 16], strides = [1, 1, 1]} : vector<16x8x16xf32> to vector<14x8x16xf32>
    %6 = vector.extract_strided_slice %0 {offsets = [2, 0, 0], sizes = [14, 8, 16], strides = [1, 1, 1]} : vector<16x8x16xf32> to vector<14x8x16xf32>
    %7 = tpu.concatenate %4, %5, %6 in 2 : vector<14x8x16xf32>, vector<14x8x16xf32>, vector<14x8x16xf32> -> vector<14x8x48xf32>
    %8 = vector.shape_cast %7 : vector<14x8x48xf32> to vector<112x48xf32>
    %cst = arith.constant dense<0.000000e+00> : vector<112x112xf32>
    %9 = tpu.matmul %8, %1, %cst {dimension_numbers = #tpu.dot_dimension_numbers<[1], [0], [0], [1], [0, 0, 1, 1], [], []>} : vector<112x48xf32>, vector<48x112xf32>, vector<112x112xf32> -> vector<112x112xf32>
    %10 = vector.shape_cast %9 : vector<112x112xf32> to vector<14x8x112xf32>
    %11 = tpu.iota {dimensions = array<i32: 1>} : vector<1x8x1xi32>
    %c2_i32 = arith.constant 2 : i32
    %12 = vector.broadcast %c2_i32 : i32 to vector<1x8x1xi32>
    %13 = arith.cmpi slt, %11, %12 : vector<1x8x1xi32>
    %14 = arith.extui %13 : vector<1x8x1xi1> to vector<1x8x1xi32>
    %15 = arith.sitofp %14 : vector<1x8x1xi32> to vector<1x8x1xf32>
    %cst_8 = arith.constant dense<0.000000e+00> : vector<8x112xf32>
    %16 = vector.multi_reduction <add>, %10, %cst_8 [0] : vector<14x8x112xf32> to vector<8x112xf32>
    %cst_9 = arith.constant dense<0.000000e+00> : vector<112xf32>
    %17 = vector.multi_reduction <add>, %16, %cst_9 [0] : vector<8x112xf32> to vector<112xf32>
    %18 = vector.shape_cast %17 : vector<112xf32> to vector<1x112xf32>
    %19 = vector.extract_strided_slice %18 {offsets = [0, 0], sizes = [1, 8], strides = [1, 1]} : vector<1x112xf32> to vector<1x8xf32>
    %20 = vector.extract_strided_slice %18 {offsets = [0, 8], sizes = [1, 8], strides = [1, 1]} : vector<1x112xf32> to vector<1x8xf32>
    %21 = arith.addf %19, %20 : vector<1x8xf32>
    %22 = vector.extract_strided_slice %18 {offsets = [0, 16], sizes = [1, 8], strides = [1, 1]} : vector<1x112xf32> to vector<1x8xf32>
    %23 = arith.addf %21, %22 : vector<1x8xf32>
    %24 = vector.extract_strided_slice %18 {offsets = [0, 24], sizes = [1, 8], strides = [1, 1]} : vector<1x112xf32> to vector<1x8xf32>
    %25 = arith.addf %23, %24 : vector<1x8xf32>
    %26 = vector.extract_strided_slice %18 {offsets = [0, 32], sizes = [1, 8], strides = [1, 1]} : vector<1x112xf32> to vector<1x8xf32>
    %27 = arith.addf %25, %26 : vector<1x8xf32>
    %28 = vector.extract_strided_slice %18 {offsets = [0, 40], sizes = [1, 8], strides = [1, 1]} : vector<1x112xf32> to vector<1x8xf32>
    %29 = arith.addf %27, %28 : vector<1x8xf32>
    %30 = vector.extract_strided_slice %18 {offsets = [0, 48], sizes = [1, 8], strides = [1, 1]} : vector<1x112xf32> to vector<1x8xf32>
    %31 = arith.addf %29, %30 : vector<1x8xf32>
    %32 = vector.extract_strided_slice %18 {offsets = [0, 56], sizes = [1, 8], strides = [1, 1]} : vector<1x112xf32> to vector<1x8xf32>
    %33 = arith.addf %31, %32 : vector<1x8xf32>
    %34 = vector.extract_strided_slice %18 {offsets = [0, 64], sizes = [1, 8], strides = [1, 1]} : vector<1x112xf32> to vector<1x8xf32>
    %35 = arith.addf %33, %34 : vector<1x8xf32>
    %36 = vector.extract_strided_slice %18 {offsets = [0, 72], sizes = [1, 8], strides = [1, 1]} : vector<1x112xf32> to vector<1x8xf32>
    %37 = arith.addf %35, %36 : vector<1x8xf32>
    %38 = vector.extract_strided_slice %18 {offsets = [0, 80], sizes = [1, 8], strides = [1, 1]} : vector<1x112xf32> to vector<1x8xf32>
    %39 = arith.addf %37, %38 : vector<1x8xf32>
    %40 = vector.extract_strided_slice %18 {offsets = [0, 88], sizes = [1, 8], strides = [1, 1]} : vector<1x112xf32> to vector<1x8xf32>
    %41 = arith.addf %39, %40 : vector<1x8xf32>
    %42 = vector.extract_strided_slice %18 {offsets = [0, 96], sizes = [1, 8], strides = [1, 1]} : vector<1x112xf32> to vector<1x8xf32>
    %43 = arith.addf %41, %42 : vector<1x8xf32>
    %44 = vector.extract_strided_slice %18 {offsets = [0, 104], sizes = [1, 8], strides = [1, 1]} : vector<1x112xf32> to vector<1x8xf32>
    %45 = arith.addf %43, %44 : vector<1x8xf32>
    %cst_10 = arith.constant 3.920000e+02 : f32
    %46 = vector.broadcast %cst_10 : f32 to vector<1x8xf32>
    %47 = arith.divf %45, %46 : vector<1x8xf32>
    %48 = tpu.concatenate %47, %47, %47, %47, %47, %47, %47, %47, %47, %47, %47, %47, %47, %47 in 1 : vector<1x8xf32>, vector<1x8xf32>, vector<1x8xf32>, vector<1x8xf32>, vector<1x8xf32>, vector<1x8xf32>, vector<1x8xf32>, vector<1x8xf32>, vector<1x8xf32>, vector<1x8xf32>, vector<1x8xf32>, vector<1x8xf32>, vector<1x8xf32>, vector<1x8xf32> -> vector<1x112xf32>
    %49 = vector.shape_cast %48 : vector<1x112xf32> to vector<1x1x112xf32>
    %50 = vector.broadcast %49 : vector<1x1x112xf32> to vector<14x8x112xf32>
    %51 = arith.subf %10, %50 : vector<14x8x112xf32>
    %52 = vector.broadcast %15 : vector<1x8x1xf32> to vector<14x8x112xf32>
    %53 = arith.mulf %51, %52 : vector<14x8x112xf32>
    %54 = arith.mulf %53, %53 : vector<14x8x112xf32>
    %cst_11 = arith.constant dense<0.000000e+00> : vector<8x112xf32>
    %55 = vector.multi_reduction <add>, %54, %cst_11 [0] : vector<14x8x112xf32> to vector<8x112xf32>
    %cst_12 = arith.constant dense<0.000000e+00> : vector<112xf32>
    %56 = vector.multi_reduction <add>, %55, %cst_12 [0] : vector<8x112xf32> to vector<112xf32>
    %57 = vector.shape_cast %56 : vector<112xf32> to vector<1x112xf32>
    %58 = vector.extract_strided_slice %57 {offsets = [0, 0], sizes = [1, 8], strides = [1, 1]} : vector<1x112xf32> to vector<1x8xf32>
    %59 = vector.extract_strided_slice %57 {offsets = [0, 8], sizes = [1, 8], strides = [1, 1]} : vector<1x112xf32> to vector<1x8xf32>
    %60 = arith.addf %58, %59 : vector<1x8xf32>
    %61 = vector.extract_strided_slice %57 {offsets = [0, 16], sizes = [1, 8], strides = [1, 1]} : vector<1x112xf32> to vector<1x8xf32>
    %62 = arith.addf %60, %61 : vector<1x8xf32>
    %63 = vector.extract_strided_slice %57 {offsets = [0, 24], sizes = [1, 8], strides = [1, 1]} : vector<1x112xf32> to vector<1x8xf32>
    %64 = arith.addf %62, %63 : vector<1x8xf32>
    %65 = vector.extract_strided_slice %57 {offsets = [0, 32], sizes = [1, 8], strides = [1, 1]} : vector<1x112xf32> to vector<1x8xf32>
    %66 = arith.addf %64, %65 : vector<1x8xf32>
    %67 = vector.extract_strided_slice %57 {offsets = [0, 40], sizes = [1, 8], strides = [1, 1]} : vector<1x112xf32> to vector<1x8xf32>
    %68 = arith.addf %66, %67 : vector<1x8xf32>
    %69 = vector.extract_strided_slice %57 {offsets = [0, 48], sizes = [1, 8], strides = [1, 1]} : vector<1x112xf32> to vector<1x8xf32>
    %70 = arith.addf %68, %69 : vector<1x8xf32>
    %71 = vector.extract_strided_slice %57 {offsets = [0, 56], sizes = [1, 8], strides = [1, 1]} : vector<1x112xf32> to vector<1x8xf32>
    %72 = arith.addf %70, %71 : vector<1x8xf32>
    %73 = vector.extract_strided_slice %57 {offsets = [0, 64], sizes = [1, 8], strides = [1, 1]} : vector<1x112xf32> to vector<1x8xf32>
    %74 = arith.addf %72, %73 : vector<1x8xf32>
    %75 = vector.extract_strided_slice %57 {offsets = [0, 72], sizes = [1, 8], strides = [1, 1]} : vector<1x112xf32> to vector<1x8xf32>
    %76 = arith.addf %74, %75 : vector<1x8xf32>
    %77 = vector.extract_strided_slice %57 {offsets = [0, 80], sizes = [1, 8], strides = [1, 1]} : vector<1x112xf32> to vector<1x8xf32>
    %78 = arith.addf %76, %77 : vector<1x8xf32>
    %79 = vector.extract_strided_slice %57 {offsets = [0, 88], sizes = [1, 8], strides = [1, 1]} : vector<1x112xf32> to vector<1x8xf32>
    %80 = arith.addf %78, %79 : vector<1x8xf32>
    %81 = vector.extract_strided_slice %57 {offsets = [0, 96], sizes = [1, 8], strides = [1, 1]} : vector<1x112xf32> to vector<1x8xf32>
    %82 = arith.addf %80, %81 : vector<1x8xf32>
    %83 = vector.extract_strided_slice %57 {offsets = [0, 104], sizes = [1, 8], strides = [1, 1]} : vector<1x112xf32> to vector<1x8xf32>
    %84 = arith.addf %82, %83 : vector<1x8xf32>
    %cst_13 = arith.constant 3.920000e+02 : f32
    %85 = vector.broadcast %cst_13 : f32 to vector<1x8xf32>
    %86 = arith.divf %84, %85 : vector<1x8xf32>
    %87 = tpu.concatenate %86, %86, %86, %86, %86, %86, %86, %86, %86, %86, %86, %86, %86, %86 in 1 : vector<1x8xf32>, vector<1x8xf32>, vector<1x8xf32>, vector<1x8xf32>, vector<1x8xf32>, vector<1x8xf32>, vector<1x8xf32>, vector<1x8xf32>, vector<1x8xf32>, vector<1x8xf32>, vector<1x8xf32>, vector<1x8xf32>, vector<1x8xf32>, vector<1x8xf32> -> vector<1x112xf32>
    %cst_14 = arith.constant 9.99999974E-6 : f32
    %88 = vector.broadcast %cst_14 : f32 to vector<1x112xf32>
    %89 = arith.addf %87, %88 : vector<1x112xf32>
    %90 = math.rsqrt %89 : vector<1x112xf32>
    %91 = arith.mulf %2, %90 : vector<1x112xf32>
    %92 = vector.shape_cast %91 : vector<1x112xf32> to vector<1x1x112xf32>
    %93 = vector.broadcast %92 : vector<1x1x112xf32> to vector<14x8x112xf32>
    %94 = arith.mulf %51, %93 : vector<14x8x112xf32>
    %95 = vector.shape_cast %3 : vector<1x112xf32> to vector<1x1x112xf32>
    %96 = vector.broadcast %95 : vector<1x1x112xf32> to vector<14x8x112xf32>
    %97 = arith.addf %94, %96 : vector<14x8x112xf32>
    %cst_15 = arith.constant 0.000000e+00 : f32
    %98 = vector.broadcast %cst_15 : f32 to vector<14x8x112xf32>
    %99 = arith.maximumf %97, %98 : vector<14x8x112xf32>
    %100 = vector.broadcast %15 : vector<1x8x1xf32> to vector<14x8x112xf32>
    %101 = arith.mulf %99, %100 : vector<14x8x112xf32>
    %102 = vector.extract_strided_slice %101 {offsets = [0, 0, 0], sizes = [1, 8, 112], strides = [1, 1, 1]} : vector<14x8x112xf32> to vector<1x8x112xf32>
    %103 = vector.extract_strided_slice %101 {offsets = [1, 0, 0], sizes = [1, 8, 112], strides = [1, 1, 1]} : vector<14x8x112xf32> to vector<1x8x112xf32>
    %104 = arith.maximumf %102, %103 : vector<1x8x112xf32>
    %105 = vector.extract_strided_slice %101 {offsets = [2, 0, 0], sizes = [1, 8, 112], strides = [1, 1, 1]} : vector<14x8x112xf32> to vector<1x8x112xf32>
    %106 = vector.extract_strided_slice %101 {offsets = [3, 0, 0], sizes = [1, 8, 112], strides = [1, 1, 1]} : vector<14x8x112xf32> to vector<1x8x112xf32>
    %107 = arith.maximumf %105, %106 : vector<1x8x112xf32>
    %108 = vector.extract_strided_slice %101 {offsets = [4, 0, 0], sizes = [1, 8, 112], strides = [1, 1, 1]} : vector<14x8x112xf32> to vector<1x8x112xf32>
    %109 = vector.extract_strided_slice %101 {offsets = [5, 0, 0], sizes = [1, 8, 112], strides = [1, 1, 1]} : vector<14x8x112xf32> to vector<1x8x112xf32>
    %110 = arith.maximumf %108, %109 : vector<1x8x112xf32>
    %111 = vector.extract_strided_slice %101 {offsets = [6, 0, 0], sizes = [1, 8, 112], strides = [1, 1, 1]} : vector<14x8x112xf32> to vector<1x8x112xf32>
    %112 = vector.extract_strided_slice %101 {offsets = [7, 0, 0], sizes = [1, 8, 112], strides = [1, 1, 1]} : vector<14x8x112xf32> to vector<1x8x112xf32>
    %113 = arith.maximumf %111, %112 : vector<1x8x112xf32>
    %114 = vector.extract_strided_slice %101 {offsets = [8, 0, 0], sizes = [1, 8, 112], strides = [1, 1, 1]} : vector<14x8x112xf32> to vector<1x8x112xf32>
    %115 = vector.extract_strided_slice %101 {offsets = [9, 0, 0], sizes = [1, 8, 112], strides = [1, 1, 1]} : vector<14x8x112xf32> to vector<1x8x112xf32>
    %116 = arith.maximumf %114, %115 : vector<1x8x112xf32>
    %117 = vector.extract_strided_slice %101 {offsets = [10, 0, 0], sizes = [1, 8, 112], strides = [1, 1, 1]} : vector<14x8x112xf32> to vector<1x8x112xf32>
    %118 = vector.extract_strided_slice %101 {offsets = [11, 0, 0], sizes = [1, 8, 112], strides = [1, 1, 1]} : vector<14x8x112xf32> to vector<1x8x112xf32>
    %119 = arith.maximumf %117, %118 : vector<1x8x112xf32>
    %120 = vector.extract_strided_slice %101 {offsets = [12, 0, 0], sizes = [1, 8, 112], strides = [1, 1, 1]} : vector<14x8x112xf32> to vector<1x8x112xf32>
    %121 = vector.extract_strided_slice %101 {offsets = [13, 0, 0], sizes = [1, 8, 112], strides = [1, 1, 1]} : vector<14x8x112xf32> to vector<1x8x112xf32>
    %122 = arith.maximumf %120, %121 : vector<1x8x112xf32>
    %123 = tpu.concatenate %104, %107, %110, %113, %116, %119, %122 in 0 : vector<1x8x112xf32>, vector<1x8x112xf32>, vector<1x8x112xf32>, vector<1x8x112xf32>, vector<1x8x112xf32>, vector<1x8x112xf32>, vector<1x8x112xf32> -> vector<7x8x112xf32>
    %124 = vector.extract_strided_slice %123 {offsets = [0, 0, 0], sizes = [7, 8, 8], strides = [1, 1, 1]} : vector<7x8x112xf32> to vector<7x8x8xf32>
    %125 = vector.extract_strided_slice %123 {offsets = [0, 0, 8], sizes = [7, 8, 8], strides = [1, 1, 1]} : vector<7x8x112xf32> to vector<7x8x8xf32>
    %126 = arith.maximumf %124, %125 : vector<7x8x8xf32>
    %127 = vector.extract_strided_slice %123 {offsets = [0, 0, 16], sizes = [7, 8, 8], strides = [1, 1, 1]} : vector<7x8x112xf32> to vector<7x8x8xf32>
    %128 = vector.extract_strided_slice %123 {offsets = [0, 0, 24], sizes = [7, 8, 8], strides = [1, 1, 1]} : vector<7x8x112xf32> to vector<7x8x8xf32>
    %129 = arith.maximumf %127, %128 : vector<7x8x8xf32>
    %130 = vector.extract_strided_slice %123 {offsets = [0, 0, 32], sizes = [7, 8, 8], strides = [1, 1, 1]} : vector<7x8x112xf32> to vector<7x8x8xf32>
    %131 = vector.extract_strided_slice %123 {offsets = [0, 0, 40], sizes = [7, 8, 8], strides = [1, 1, 1]} : vector<7x8x112xf32> to vector<7x8x8xf32>
    %132 = arith.maximumf %130, %131 : vector<7x8x8xf32>
    %133 = vector.extract_strided_slice %123 {offsets = [0, 0, 48], sizes = [7, 8, 8], strides = [1, 1, 1]} : vector<7x8x112xf32> to vector<7x8x8xf32>
    %134 = vector.extract_strided_slice %123 {offsets = [0, 0, 56], sizes = [7, 8, 8], strides = [1, 1, 1]} : vector<7x8x112xf32> to vector<7x8x8xf32>
    %135 = arith.maximumf %133, %134 : vector<7x8x8xf32>
    %136 = vector.extract_strided_slice %123 {offsets = [0, 0, 64], sizes = [7, 8, 8], strides = [1, 1, 1]} : vector<7x8x112xf32> to vector<7x8x8xf32>
    %137 = vector.extract_strided_slice %123 {offsets = [0, 0, 72], sizes = [7, 8, 8], strides = [1, 1, 1]} : vector<7x8x112xf32> to vector<7x8x8xf32>
    %138 = arith.maximumf %136, %137 : vector<7x8x8xf32>
    %139 = vector.extract_strided_slice %123 {offsets = [0, 0, 80], sizes = [7, 8, 8], strides = [1, 1, 1]} : vector<7x8x112xf32> to vector<7x8x8xf32>
    %140 = vector.extract_strided_slice %123 {offsets = [0, 0, 88], sizes = [7, 8, 8], strides = [1, 1, 1]} : vector<7x8x112xf32> to vector<7x8x8xf32>
    %141 = arith.maximumf %139, %140 : vector<7x8x8xf32>
    %142 = vector.extract_strided_slice %123 {offsets = [0, 0, 96], sizes = [7, 8, 8], strides = [1, 1, 1]} : vector<7x8x112xf32> to vector<7x8x8xf32>
    %143 = vector.extract_strided_slice %123 {offsets = [0, 0, 104], sizes = [7, 8, 8], strides = [1, 1, 1]} : vector<7x8x112xf32> to vector<7x8x8xf32>
    %144 = arith.maximumf %142, %143 : vector<7x8x8xf32>
    %145 = tpu.concatenate %126, %129, %132, %135, %138, %141, %144 in 2 : vector<7x8x8xf32>, vector<7x8x8xf32>, vector<7x8x8xf32>, vector<7x8x8xf32>, vector<7x8x8xf32>, vector<7x8x8xf32>, vector<7x8x8xf32> -> vector<7x8x56xf32>
    %c0_16 = arith.constant 0 : index
    %c0_17 = arith.constant 0 : index
    %146 = vector.load %arg4[%c0_16, %c0_17] : memref<168x80xf32, #tpu.memory_space<vmem>>, vector<168x80xf32>
    %c0_18 = arith.constant 0 : index
    %c0_19 = arith.constant 0 : index
    %147 = vector.load %arg5[%c0_18, %c0_19] : memref<1x80xf32, #tpu.memory_space<vmem>>, vector<1x80xf32>
    %c0_20 = arith.constant 0 : index
    %c0_21 = arith.constant 0 : index
    %148 = vector.load %arg6[%c0_20, %c0_21] : memref<1x80xf32, #tpu.memory_space<vmem>>, vector<1x80xf32>
    %149 = vector.extract_strided_slice %145 {offsets = [0, 0, 0], sizes = [5, 8, 56], strides = [1, 1, 1]} : vector<7x8x56xf32> to vector<5x8x56xf32>
    %150 = vector.extract_strided_slice %145 {offsets = [1, 0, 0], sizes = [5, 8, 56], strides = [1, 1, 1]} : vector<7x8x56xf32> to vector<5x8x56xf32>
    %151 = vector.extract_strided_slice %145 {offsets = [2, 0, 0], sizes = [5, 8, 56], strides = [1, 1, 1]} : vector<7x8x56xf32> to vector<5x8x56xf32>
    %152 = tpu.concatenate %149, %150, %151 in 2 : vector<5x8x56xf32>, vector<5x8x56xf32>, vector<5x8x56xf32> -> vector<5x8x168xf32>
    %153 = vector.shape_cast %152 : vector<5x8x168xf32> to vector<40x168xf32>
    %cst_22 = arith.constant dense<0.000000e+00> : vector<40x80xf32>
    %154 = tpu.matmul %153, %146, %cst_22 {dimension_numbers = #tpu.dot_dimension_numbers<[1], [0], [0], [1], [0, 0, 1, 1], [], []>} : vector<40x168xf32>, vector<168x80xf32>, vector<40x80xf32> -> vector<40x80xf32>
    %155 = vector.shape_cast %154 : vector<40x80xf32> to vector<5x8x80xf32>
    %156 = tpu.iota {dimensions = array<i32: 1>} : vector<1x8x1xi32>
    %c2_i32_23 = arith.constant 2 : i32
    %157 = vector.broadcast %c2_i32_23 : i32 to vector<1x8x1xi32>
    %158 = arith.cmpi slt, %156, %157 : vector<1x8x1xi32>
    %159 = arith.extui %158 : vector<1x8x1xi1> to vector<1x8x1xi32>
    %160 = arith.sitofp %159 : vector<1x8x1xi32> to vector<1x8x1xf32>
    %cst_24 = arith.constant dense<0.000000e+00> : vector<8x80xf32>
    %161 = vector.multi_reduction <add>, %155, %cst_24 [0] : vector<5x8x80xf32> to vector<8x80xf32>
    %cst_25 = arith.constant dense<0.000000e+00> : vector<80xf32>
    %162 = vector.multi_reduction <add>, %161, %cst_25 [0] : vector<8x80xf32> to vector<80xf32>
    %163 = vector.shape_cast %162 : vector<80xf32> to vector<1x80xf32>
    %164 = vector.extract_strided_slice %163 {offsets = [0, 0], sizes = [1, 16], strides = [1, 1]} : vector<1x80xf32> to vector<1x16xf32>
    %165 = vector.extract_strided_slice %163 {offsets = [0, 16], sizes = [1, 16], strides = [1, 1]} : vector<1x80xf32> to vector<1x16xf32>
    %166 = arith.addf %164, %165 : vector<1x16xf32>
    %167 = vector.extract_strided_slice %163 {offsets = [0, 32], sizes = [1, 16], strides = [1, 1]} : vector<1x80xf32> to vector<1x16xf32>
    %168 = arith.addf %166, %167 : vector<1x16xf32>
    %169 = vector.extract_strided_slice %163 {offsets = [0, 48], sizes = [1, 16], strides = [1, 1]} : vector<1x80xf32> to vector<1x16xf32>
    %170 = arith.addf %168, %169 : vector<1x16xf32>
    %171 = vector.extract_strided_slice %163 {offsets = [0, 64], sizes = [1, 16], strides = [1, 1]} : vector<1x80xf32> to vector<1x16xf32>
    %172 = arith.addf %170, %171 : vector<1x16xf32>
    %cst_26 = arith.constant 5.000000e+01 : f32
    %173 = vector.broadcast %cst_26 : f32 to vector<1x16xf32>
    %174 = arith.divf %172, %173 : vector<1x16xf32>
    %175 = tpu.concatenate %174, %174, %174, %174, %174 in 1 : vector<1x16xf32>, vector<1x16xf32>, vector<1x16xf32>, vector<1x16xf32>, vector<1x16xf32> -> vector<1x80xf32>
    %176 = vector.shape_cast %175 : vector<1x80xf32> to vector<1x1x80xf32>
    %177 = vector.broadcast %176 : vector<1x1x80xf32> to vector<5x8x80xf32>
    %178 = arith.subf %155, %177 : vector<5x8x80xf32>
    %179 = vector.broadcast %160 : vector<1x8x1xf32> to vector<5x8x80xf32>
    %180 = arith.mulf %178, %179 : vector<5x8x80xf32>
    %181 = arith.mulf %180, %180 : vector<5x8x80xf32>
    %cst_27 = arith.constant dense<0.000000e+00> : vector<8x80xf32>
    %182 = vector.multi_reduction <add>, %181, %cst_27 [0] : vector<5x8x80xf32> to vector<8x80xf32>
    %cst_28 = arith.constant dense<0.000000e+00> : vector<80xf32>
    %183 = vector.multi_reduction <add>, %182, %cst_28 [0] : vector<8x80xf32> to vector<80xf32>
    %184 = vector.shape_cast %183 : vector<80xf32> to vector<1x80xf32>
    %185 = vector.extract_strided_slice %184 {offsets = [0, 0], sizes = [1, 16], strides = [1, 1]} : vector<1x80xf32> to vector<1x16xf32>
    %186 = vector.extract_strided_slice %184 {offsets = [0, 16], sizes = [1, 16], strides = [1, 1]} : vector<1x80xf32> to vector<1x16xf32>
    %187 = arith.addf %185, %186 : vector<1x16xf32>
    %188 = vector.extract_strided_slice %184 {offsets = [0, 32], sizes = [1, 16], strides = [1, 1]} : vector<1x80xf32> to vector<1x16xf32>
    %189 = arith.addf %187, %188 : vector<1x16xf32>
    %190 = vector.extract_strided_slice %184 {offsets = [0, 48], sizes = [1, 16], strides = [1, 1]} : vector<1x80xf32> to vector<1x16xf32>
    %191 = arith.addf %189, %190 : vector<1x16xf32>
    %192 = vector.extract_strided_slice %184 {offsets = [0, 64], sizes = [1, 16], strides = [1, 1]} : vector<1x80xf32> to vector<1x16xf32>
    %193 = arith.addf %191, %192 : vector<1x16xf32>
    %cst_29 = arith.constant 5.000000e+01 : f32
    %194 = vector.broadcast %cst_29 : f32 to vector<1x16xf32>
    %195 = arith.divf %193, %194 : vector<1x16xf32>
    %196 = tpu.concatenate %195, %195, %195, %195, %195 in 1 : vector<1x16xf32>, vector<1x16xf32>, vector<1x16xf32>, vector<1x16xf32>, vector<1x16xf32> -> vector<1x80xf32>
    %cst_30 = arith.constant 9.99999974E-6 : f32
    %197 = vector.broadcast %cst_30 : f32 to vector<1x80xf32>
    %198 = arith.addf %196, %197 : vector<1x80xf32>
    %199 = math.rsqrt %198 : vector<1x80xf32>
    %200 = arith.mulf %147, %199 : vector<1x80xf32>
    %201 = vector.shape_cast %200 : vector<1x80xf32> to vector<1x1x80xf32>
    %202 = vector.broadcast %201 : vector<1x1x80xf32> to vector<5x8x80xf32>
    %203 = arith.mulf %178, %202 : vector<5x8x80xf32>
    %204 = vector.shape_cast %148 : vector<1x80xf32> to vector<1x1x80xf32>
    %205 = vector.broadcast %204 : vector<1x1x80xf32> to vector<5x8x80xf32>
    %206 = arith.addf %203, %205 : vector<5x8x80xf32>
    %cst_31 = arith.constant 0.000000e+00 : f32
    %207 = vector.broadcast %cst_31 : f32 to vector<5x8x80xf32>
    %208 = arith.maximumf %206, %207 : vector<5x8x80xf32>
    %209 = vector.broadcast %160 : vector<1x8x1xf32> to vector<5x8x80xf32>
    %210 = arith.mulf %208, %209 : vector<5x8x80xf32>
    %211 = vector.extract_strided_slice %210 {offsets = [0, 0, 0], sizes = [1, 8, 80], strides = [1, 1, 1]} : vector<5x8x80xf32> to vector<1x8x80xf32>
    %212 = vector.shape_cast %211 : vector<1x8x80xf32> to vector<8x80xf32>
    %c0_32 = arith.constant 0 : index
    %c0_33 = arith.constant 0 : index
    %c0_34 = arith.constant 0 : index
    %213 = vector.load %arg7[%c0_32, %c0_33, %c0_34] : memref<5x80x128xf32, #tpu.memory_space<vmem>>, vector<1x80x128xf32>
    %214 = vector.shape_cast %213 : vector<1x80x128xf32> to vector<80x128xf32>
    %cst_35 = arith.constant dense<0.000000e+00> : vector<8x128xf32>
    %215 = tpu.matmul %212, %214, %cst_35 {dimension_numbers = #tpu.dot_dimension_numbers<[1], [0], [0], [1], [0, 0, 1, 1], [], []>} : vector<8x80xf32>, vector<80x128xf32>, vector<8x128xf32> -> vector<8x128xf32>
    %216 = vector.extract_strided_slice %210 {offsets = [1, 0, 0], sizes = [1, 8, 80], strides = [1, 1, 1]} : vector<5x8x80xf32> to vector<1x8x80xf32>
    %217 = vector.shape_cast %216 : vector<1x8x80xf32> to vector<8x80xf32>
    %c1 = arith.constant 1 : index
    %c0_36 = arith.constant 0 : index
    %c0_37 = arith.constant 0 : index
    %218 = vector.load %arg7[%c1, %c0_36, %c0_37] : memref<5x80x128xf32, #tpu.memory_space<vmem>>, vector<1x80x128xf32>
    %219 = vector.shape_cast %218 : vector<1x80x128xf32> to vector<80x128xf32>
    %cst_38 = arith.constant dense<0.000000e+00> : vector<8x128xf32>
    %220 = tpu.matmul %217, %219, %cst_38 {dimension_numbers = #tpu.dot_dimension_numbers<[1], [0], [0], [1], [0, 0, 1, 1], [], []>} : vector<8x80xf32>, vector<80x128xf32>, vector<8x128xf32> -> vector<8x128xf32>
    %221 = arith.addf %215, %220 : vector<8x128xf32>
    %222 = vector.extract_strided_slice %210 {offsets = [2, 0, 0], sizes = [1, 8, 80], strides = [1, 1, 1]} : vector<5x8x80xf32> to vector<1x8x80xf32>
    %223 = vector.shape_cast %222 : vector<1x8x80xf32> to vector<8x80xf32>
    %c2 = arith.constant 2 : index
    %c0_39 = arith.constant 0 : index
    %c0_40 = arith.constant 0 : index
    %224 = vector.load %arg7[%c2, %c0_39, %c0_40] : memref<5x80x128xf32, #tpu.memory_space<vmem>>, vector<1x80x128xf32>
    %225 = vector.shape_cast %224 : vector<1x80x128xf32> to vector<80x128xf32>
    %cst_41 = arith.constant dense<0.000000e+00> : vector<8x128xf32>
    %226 = tpu.matmul %223, %225, %cst_41 {dimension_numbers = #tpu.dot_dimension_numbers<[1], [0], [0], [1], [0, 0, 1, 1], [], []>} : vector<8x80xf32>, vector<80x128xf32>, vector<8x128xf32> -> vector<8x128xf32>
    %227 = arith.addf %221, %226 : vector<8x128xf32>
    %228 = vector.extract_strided_slice %210 {offsets = [3, 0, 0], sizes = [1, 8, 80], strides = [1, 1, 1]} : vector<5x8x80xf32> to vector<1x8x80xf32>
    %229 = vector.shape_cast %228 : vector<1x8x80xf32> to vector<8x80xf32>
    %c3 = arith.constant 3 : index
    %c0_42 = arith.constant 0 : index
    %c0_43 = arith.constant 0 : index
    %230 = vector.load %arg7[%c3, %c0_42, %c0_43] : memref<5x80x128xf32, #tpu.memory_space<vmem>>, vector<1x80x128xf32>
    %231 = vector.shape_cast %230 : vector<1x80x128xf32> to vector<80x128xf32>
    %cst_44 = arith.constant dense<0.000000e+00> : vector<8x128xf32>
    %232 = tpu.matmul %229, %231, %cst_44 {dimension_numbers = #tpu.dot_dimension_numbers<[1], [0], [0], [1], [0, 0, 1, 1], [], []>} : vector<8x80xf32>, vector<80x128xf32>, vector<8x128xf32> -> vector<8x128xf32>
    %233 = arith.addf %227, %232 : vector<8x128xf32>
    %234 = vector.extract_strided_slice %210 {offsets = [4, 0, 0], sizes = [1, 8, 80], strides = [1, 1, 1]} : vector<5x8x80xf32> to vector<1x8x80xf32>
    %235 = vector.shape_cast %234 : vector<1x8x80xf32> to vector<8x80xf32>
    %c4 = arith.constant 4 : index
    %c0_45 = arith.constant 0 : index
    %c0_46 = arith.constant 0 : index
    %236 = vector.load %arg7[%c4, %c0_45, %c0_46] : memref<5x80x128xf32, #tpu.memory_space<vmem>>, vector<1x80x128xf32>
    %237 = vector.shape_cast %236 : vector<1x80x128xf32> to vector<80x128xf32>
    %cst_47 = arith.constant dense<0.000000e+00> : vector<8x128xf32>
    %238 = tpu.matmul %235, %237, %cst_47 {dimension_numbers = #tpu.dot_dimension_numbers<[1], [0], [0], [1], [0, 0, 1, 1], [], []>} : vector<8x80xf32>, vector<80x128xf32>, vector<8x128xf32> -> vector<8x128xf32>
    %239 = arith.addf %233, %238 : vector<8x128xf32>
    %240 = tpu.iota {dimensions = array<i32: 0>} : vector<8x1xi32>
    %c2_i32_48 = arith.constant 2 : i32
    %241 = vector.broadcast %c2_i32_48 : i32 to vector<8x1xi32>
    %242 = arith.cmpi slt, %240, %241 : vector<8x1xi32>
    %243 = arith.extui %242 : vector<8x1xi1> to vector<8x1xi32>
    %244 = arith.sitofp %243 : vector<8x1xi32> to vector<8x1xf32>
    %245 = vector.broadcast %244 : vector<8x1xf32> to vector<8x128xf32>
    %246 = arith.mulf %239, %245 : vector<8x128xf32>
    %cst_49 = arith.constant dense<0.000000e+00> : vector<128xf32>
    %247 = vector.multi_reduction <add>, %246, %cst_49 [0] : vector<8x128xf32> to vector<128xf32>
    %248 = vector.shape_cast %247 : vector<128xf32> to vector<1x128xf32>
    %cst_50 = arith.constant 2.000000e+00 : f32
    %249 = vector.broadcast %cst_50 : f32 to vector<1x128xf32>
    %250 = arith.divf %248, %249 : vector<1x128xf32>
    %251 = vector.broadcast %250 : vector<1x128xf32> to vector<8x128xf32>
    %252 = arith.subf %239, %251 : vector<8x128xf32>
    %253 = vector.broadcast %244 : vector<8x1xf32> to vector<8x128xf32>
    %254 = arith.mulf %252, %253 : vector<8x128xf32>
    %255 = arith.mulf %254, %254 : vector<8x128xf32>
    %cst_51 = arith.constant dense<0.000000e+00> : vector<128xf32>
    %256 = vector.multi_reduction <add>, %255, %cst_51 [0] : vector<8x128xf32> to vector<128xf32>
    %257 = vector.shape_cast %256 : vector<128xf32> to vector<1x128xf32>
    %cst_52 = arith.constant 2.000000e+00 : f32
    %258 = vector.broadcast %cst_52 : f32 to vector<1x128xf32>
    %259 = arith.divf %257, %258 : vector<1x128xf32>
    %cst_53 = arith.constant 9.99999974E-6 : f32
    %260 = vector.broadcast %cst_53 : f32 to vector<1x128xf32>
    %261 = arith.addf %259, %260 : vector<1x128xf32>
    %262 = math.rsqrt %261 : vector<1x128xf32>
    %263 = vector.broadcast %262 : vector<1x128xf32> to vector<8x128xf32>
    %264 = arith.mulf %252, %263 : vector<8x128xf32>
    %c0_54 = arith.constant 0 : index
    %c0_55 = arith.constant 0 : index
    %265 = vector.load %arg8[%c0_54, %c0_55] : memref<1x128xf32, #tpu.memory_space<vmem>>, vector<1x128xf32>
    %266 = vector.broadcast %265 : vector<1x128xf32> to vector<8x128xf32>
    %267 = arith.mulf %264, %266 : vector<8x128xf32>
    %c0_56 = arith.constant 0 : index
    %c0_57 = arith.constant 0 : index
    %268 = vector.load %arg9[%c0_56, %c0_57] : memref<1x128xf32, #tpu.memory_space<vmem>>, vector<1x128xf32>
    %269 = vector.broadcast %268 : vector<1x128xf32> to vector<8x128xf32>
    %270 = arith.addf %267, %269 : vector<8x128xf32>
    %cst_58 = arith.constant 0.000000e+00 : f32
    %271 = vector.broadcast %cst_58 : f32 to vector<8x128xf32>
    %272 = arith.maximumf %270, %271 : vector<8x128xf32>
    %c0_59 = arith.constant 0 : index
    %c0_60 = arith.constant 0 : index
    %273 = vector.load %arg10[%c0_59, %c0_60] : memref<128x128xf32, #tpu.memory_space<vmem>>, vector<128x128xf32>
    %cst_61 = arith.constant dense<0.000000e+00> : vector<8x128xf32>
    %274 = tpu.matmul %272, %273, %cst_61 {dimension_numbers = #tpu.dot_dimension_numbers<[1], [0], [0], [1], [0, 0, 1, 1], [], []>} : vector<8x128xf32>, vector<128x128xf32>, vector<8x128xf32> -> vector<8x128xf32>
    %c0_62 = arith.constant 0 : index
    %c0_63 = arith.constant 0 : index
    %275 = vector.load %arg11[%c0_62, %c0_63] : memref<1x128xf32, #tpu.memory_space<vmem>>, vector<1x128xf32>
    %276 = vector.broadcast %275 : vector<1x128xf32> to vector<8x128xf32>
    %277 = arith.addf %274, %276 : vector<8x128xf32>
    %278 = tpu.iota {dimensions = array<i32: 1>} : vector<8x128xi32>
    %c0_i32 = arith.constant 0 : i32
    %279 = vector.broadcast %c0_i32 : i32 to vector<8x128xi32>
    %280 = arith.cmpi eq, %278, %279 : vector<8x128xi32>
    %cst_64 = arith.constant 0.000000e+00 : f32
    %281 = vector.broadcast %cst_64 : f32 to vector<8x128xf32>
    %282 = arith.subf %281, %277 : vector<8x128xf32>
    %283 = math.exp %282 : vector<8x128xf32>
    %cst_65 = arith.constant 1.000000e+00 : f32
    %284 = vector.broadcast %cst_65 : f32 to vector<8x128xf32>
    %285 = arith.addf %284, %283 : vector<8x128xf32>
    %cst_66 = arith.constant 1.000000e+00 : f32
    %286 = vector.broadcast %cst_66 : f32 to vector<8x128xf32>
    %287 = arith.divf %286, %285 : vector<8x128xf32>
    %288 = arith.select %280, %287, %277 : vector<8x128xi1>, vector<8x128xf32>
    %c0_67 = arith.constant 0 : index
    %c0_68 = arith.constant 0 : index
    %289 = vector.load %arg12[%c0_67, %c0_68] : memref<8x128xf32, #tpu.memory_space<vmem>>, vector<8x128xf32>
    tpu.vector_store %arg12[%c0_67, %c0_68], %288 {strides = array<i32>} : memref<8x128xf32, #tpu.memory_space<vmem>>, vector<8x128xf32>,
    return
  }
}

</mosaic_0001>

<llo_original>
// kernel: tile.24
$region0: #{tile.24}
  %s0 = inlined_call_operand.vmem [shape: f32[14,8], index: 0, kind: input, shape index: {}]
  %s1 = inlined_call_operand.vmem [shape: f32[1,112], index: 1, kind: output, shape index: {}]
  $region1: #{tile.24} parent=0
    #allocation0 [shape = 'u8[4096]{0}', space=vmem, size = 0x1000, scoped, tag = 'scoped mem for output reshape']
    %v2 = vld [vmem:[%s0] sm:$0x1]
    %vm3 = vcmask 64512
    %4 = vst.msk [vmem:[#allocation0] sm:$0x1] %vm3, %v2
    %s5 = scalar_lea.vmem %s0, 13
    %v6 = vld [vmem:[%s5] sm:$0x1]
    %7 = vrot.lane.b32.xlu0 %v6, 104
    %v8 = vpop.permute.xlu0 %7
    %vm9 = vcmask 917312
    %10 = vst.msk [vmem:[#allocation0] sm:$0x1] %vm9, %v8
    %s11 = scalar_lea.vmem %s0, 12
    %v12 = vld [vmem:[%s11] sm:$0x1]
    %13 = vrot.lane.b32.xlu0 %v12, 96
    %v14 = vpop.permute.xlu0 %13
    %vm15 = vcmask 851712
    %16 = vst.msk [vmem:[#allocation0] sm:$0x1] %vm15, %v14
    %s17 = scalar_lea.vmem %s0, 11
    %v18 = vld [vmem:[%s17] sm:$0x1]
    %19 = vrot.lane.b32.xlu0 %v18, 88
    %v20 = vpop.permute.xlu0 %19
    %vm21 = vcmask 786112
    %22 = vst.msk [vmem:[#allocation0] sm:$0x1] %vm21, %v20
    %s23 = scalar_lea.vmem %s0, 10
    %v24 = vld [vmem:[%s23] sm:$0x1]
    %25 = vrot.lane.b32.xlu0 %v24, 80
    %v26 = vpop.permute.xlu0 %25
    %vm27 = vcmask 720512
    %28 = vst.msk [vmem:[#allocation0] sm:$0x1] %vm27, %v26
    %s29 = scalar_lea.vmem %s0, 9
    %v30 = vld [vmem:[%s29] sm:$0x1]
    %31 = vrot.lane.b32.xlu0 %v30, 72
    %v32 = vpop.permute.xlu0 %31
    %vm33 = vcmask 654912
    %34 = vst.msk [vmem:[#allocation0] sm:$0x1] %vm33, %v32
    %s35 = scalar_lea.vmem %s0, 8
    %v36 = vld [vmem:[%s35] sm:$0x1]
    %37 = vrot.lane.b32.xlu0 %v36, 64
    %v38 = vpop.permute.xlu0 %37
    %vm39 = vcmask 589312
    %40 = vst.msk [vmem:[#allocation0] sm:$0x1] %vm39, %v38
    %s41 = scalar_lea.vmem %s0, 7
    %v42 = vld [vmem:[%s41] sm:$0x1]
    %43 = vrot.lane.b32.xlu0 %v42, 56
    %v44 = vpop.permute.xlu0 %43
    %vm45 = vcmask 523712
    %46 = vst.msk [vmem:[#allocation0] sm:$0x1] %vm45, %v44
    %s47 = scalar_lea.vmem %s0, 6
    %v48 = vld [vmem:[%s47] sm:$0x1]
    %49 = vrot.lane.b32.xlu0 %v48, 48
    %v50 = vpop.permute.xlu0 %49
    %vm51 = vcmask 458112
    %52 = vst.msk [vmem:[#allocation0] sm:$0x1] %vm51, %v50
    %s53 = scalar_lea.vmem %s0, 5
    %v54 = vld [vmem:[%s53] sm:$0x1]
    %55 = vrot.lane.b32.xlu0 %v54, 40
    %v56 = vpop.permute.xlu0 %55
    %vm57 = vcmask 392512
    %58 = vst.msk [vmem:[#allocation0] sm:$0x1] %vm57, %v56
    %s59 = scalar_lea.vmem %s0, 4
    %v60 = vld [vmem:[%s59] sm:$0x1]
    %61 = vrot.lane.b32.xlu0 %v60, 32
    %v62 = vpop.permute.xlu0 %61
    %vm63 = vcmask 326912
    %64 = vst.msk [vmem:[#allocation0] sm:$0x1] %vm63, %v62
    %s65 = scalar_lea.vmem %s0, 3
    %v66 = vld [vmem:[%s65] sm:$0x1]
    %67 = vrot.lane.b32.xlu0 %v66, 24
    %v68 = vpop.permute.xlu0 %67
    %vm69 = vcmask 261312
    %70 = vst.msk [vmem:[#allocation0] sm:$0x1] %vm69, %v68
    %s71 = scalar_lea.vmem %s0, 2
    %v72 = vld [vmem:[%s71] sm:$0x1]
    %73 = vrot.lane.b32.xlu0 %v72, 16
    %v74 = vpop.permute.xlu0 %73
    %vm75 = vcmask 195712
    %76 = vst.msk [vmem:[#allocation0] sm:$0x1] %vm75, %v74
    %s77 = scalar_lea.vmem %s0, 1
    %v78 = vld [vmem:[%s77] sm:$0x1]
    %79 = vrot.lane.b32.xlu0 %v78, 8
    %v80 = vpop.permute.xlu0 %79
    %vm81 = vcmask 130112
    %82 = vst.msk [vmem:[#allocation0] sm:$0x1] %vm81, %v80
    %s84 = sshll.u32 1, 1
    %s85 = ssub.s32 %s84, 1
    %v87 = vld [vmem:[#allocation0] sm:%s85]
    %s88 = sshll.u32 1, 1
    %s89 = ssub.s32 %s88, 1
    %90 = vst [vmem:[%s1] sm:%s89] %v87

// kernel: tile.33
$region0: #{tile.33}
  #allocation0 [shape = 's32[1]{0}', space=sflag, size = 0x4, scoped, tag = 'scoped memory for tile.33']
  %s0 = inlined_call_operand.vmem [shape: f32[16], index: 0, kind: input, shape index: {}]
  %s1 = inlined_call_operand.vmem [shape: f32[5,16], index: 1, kind: output, shape index: {}]
  // Predicated region
  $region2: #{tile.33} parent=0 // pred_check
    _
  $region3: #{tile.33} parent=0 // pred_check_branch
    %3 = sbr.rel (0) target = $region5
  $region4: #{tile.33} parent=0 // pred_region
    _
  $region5: #{tile.33} parent=0 // pred_fallthru
    _
  %v4 = vld [vmem:[%s0] ss:$0 sm:$0xff]
  %5 = vst [vmem:[%s1] sm:$0xff] %v4

// kernel: tile.34
$region0: #{tile.34}
  %s0 = inlined_call_operand.vmem [shape: f32[5,16], index: 0, kind: input, shape index: {}]
  %s1 = inlined_call_operand.vmem [shape: f32[1,80], index: 1, kind: output, shape index: {}]
  $region1: #{tile.34} parent=0
    #allocation0 [shape = 'u8[4096]{0}', space=vmem, size = 0x1000, scoped, tag = 'scoped mem for output reshape']
    %v2 = vld [vmem:[%s0] sm:$0x1]
    %vm3 = vcmask 130048
    %4 = vst.msk [vmem:[#allocation0] sm:$0x1] %vm3, %v2
    %s5 = scalar_lea.vmem %s0, 4
    %v6 = vld [vmem:[%s5] sm:$0x1]
    %7 = vrot.lane.b32.xlu0 %v6, 64
    %v8 = vpop.permute.xlu0 %7
    %vm9 = vcmask 654848
    %10 = vst.msk [vmem:[#allocation0] sm:$0x1] %vm9, %v8
    %s11 = scalar_lea.vmem %s0, 3
    %v12 = vld [vmem:[%s11] sm:$0x1]
    %13 = vrot.lane.b32.xlu0 %v12, 48
    %v14 = vpop.permute.xlu0 %13
    %vm15 = vcmask 523648
    %16 = vst.msk [vmem:[#allocation0] sm:$0x1] %vm15, %v14
    %s17 = scalar_lea.vmem %s0, 2
    %v18 = vld [vmem:[%s17] sm:$0x1]
    %19 = vrot.lane.b32.xlu0 %v18, 32
    %v20 = vpop.permute.xlu0 %19
    %vm21 = vcmask 392448
    %22 = vst.msk [vmem:[#allocation0] sm:$0x1] %vm21, %v20
    %s23 = scalar_lea.vmem %s0, 1
    %v24 = vld [vmem:[%s23] sm:$0x1]
    %25 = vrot.lane.b32.xlu0 %v24, 16
    %v26 = vpop.permute.xlu0 %25
    %vm27 = vcmask 261248
    %28 = vst.msk [vmem:[#allocation0] sm:$0x1] %vm27, %v26
    %s30 = sshll.u32 1, 1
    %s31 = ssub.s32 %s30, 1
    %v33 = vld [vmem:[#allocation0] sm:%s31]
    %s34 = sshll.u32 1, 1
    %s35 = ssub.s32 %s34, 1
    %36 = vst [vmem:[%s1] sm:%s35] %v33

// kernel: infodiscriminator_forward.1
$region0: #{infodiscriminator_forward.1}
  #allocation0 [shape = 'u32[]', space=smem, size = 0x4, offset = 0x4, fixed_abs, tag = 'smem constant byte address 0x4 - core index']
  #allocation1 [shape = 'u32[144,128]{1,0:T(1,128)}', space=vmem, size = 0x12000, scoped, tag = 'internal scratch']
  %s0 = inlined_call_operand.vmem [shape: f32[16,8,16], index: 0, kind: input, shape index: {}]
  %s1 = inlined_call_operand.vmem [shape: f32[48,112], index: 1, kind: input, shape index: {}]
  %s2 = inlined_call_operand.vmem [shape: f32[1,112], index: 2, kind: input, shape index: {}]
  %s3 = inlined_call_operand.vmem [shape: f32[1,112], index: 3, kind: input, shape index: {}]
  %s4 = inlined_call_operand.vmem [shape: f32[168,80], index: 4, kind: input, shape index: {}]
  %s5 = inlined_call_operand.vmem [shape: f32[1,80], index: 5, kind: input, shape index: {}]
  %s6 = inlined_call_operand.vmem [shape: f32[1,80], index: 6, kind: input, shape index: {}]
  %s7 = inlined_call_operand.vmem [shape: f32[5,80,128], index: 7, kind: input, shape index: {}]
  %s8 = inlined_call_operand.vmem [shape: f32[1,128], index: 8, kind: input, shape index: {}]
  %s9 = inlined_call_operand.vmem [shape: f32[1,128], index: 9, kind: input, shape index: {}]
  %s10 = inlined_call_operand.vmem [shape: f32[128,128], index: 10, kind: input, shape index: {}]
  %s11 = inlined_call_operand.vmem [shape: f32[1,128], index: 11, kind: input, shape index: {}]
  %s12 = inlined_call_operand.vmem [shape: f32[8,128], index: 12, kind: output, shape index: {}]
  %s13 = sld [smem:[#allocation0]]
  $region58: #{infodiscriminator_forward.1} parent=0
    _
  %s15 = ssub.s32 1, %s13
  %s16 = scalar_select 0, %s15, %s13
  // Predicated region
  $region2: #{infodiscriminator_forward.1} parent=0 // pred_check
    _
  $region3: #{infodiscriminator_forward.1} parent=0 // pred_check_branch
    %18 = sbr.rel (0) target = $region5
  $region4: #{infodiscriminator_forward.1} parent=0 // pred_region
    _
  $region5: #{infodiscriminator_forward.1} parent=0 // pred_fallthru
    _
  // Predicated region
  $region6: #{infodiscriminator_forward.1} parent=0 // pred_check
    _
  $region7: #{infodiscriminator_forward.1} parent=0 // pred_check_branch
    %20 = sbr.rel (0) target = $region9
  $region8: #{infodiscriminator_forward.1} parent=0 // pred_region
    _
  $region9: #{infodiscriminator_forward.1} parent=0 // pred_fallthru
    _
  // Predicated region
  $region10: #{infodiscriminator_forward.1} parent=0 // pred_check
    _
  $region11: #{infodiscriminator_forward.1} parent=0 // pred_check_branch
    %22 = sbr.rel (0) target = $region13
  $region12: #{infodiscriminator_forward.1} parent=0 // pred_region
    _
  $region13: #{infodiscriminator_forward.1} parent=0 // pred_fallthru
    _
  // Predicated region
  $region14: #{infodiscriminator_forward.1} parent=0 // pred_check
    _
  $region15: #{infodiscriminator_forward.1} parent=0 // pred_check_branch
    %24 = sbr.rel (0) target = $region17
  $region16: #{infodiscriminator_forward.1} parent=0 // pred_region
    _
  $region17: #{infodiscriminator_forward.1} parent=0 // pred_fallthru
    _
  // Predicated region
  $region18: #{infodiscriminator_forward.1} parent=0 // pred_check
    _
  $region19: #{infodiscriminator_forward.1} parent=0 // pred_check_branch
    %26 = sbr.rel (0) target = $region21
  $region20: #{infodiscriminator_forward.1} parent=0 // pred_region
    _
  $region21: #{infodiscriminator_forward.1} parent=0 // pred_fallthru
    _
  // Predicated region
  $region22: #{infodiscriminator_forward.1} parent=0 // pred_check
    _
  $region23: #{infodiscriminator_forward.1} parent=0 // pred_check_branch
    %28 = sbr.rel (0) target = $region25
  $region24: #{infodiscriminator_forward.1} parent=0 // pred_region
    _
  $region25: #{infodiscriminator_forward.1} parent=0 // pred_fallthru
    _
  // Predicated region
  $region26: #{infodiscriminator_forward.1} parent=0 // pred_check
    _
  $region27: #{infodiscriminator_forward.1} parent=0 // pred_check_branch
    %30 = sbr.rel (0) target = $region29
  $region28: #{infodiscriminator_forward.1} parent=0 // pred_region
    _
  $region29: #{infodiscriminator_forward.1} parent=0 // pred_fallthru
    _
  // Predicated region
  $region30: #{infodiscriminator_forward.1} parent=0 // pred_check
    _
  $region31: #{infodiscriminator_forward.1} parent=0 // pred_check_branch
    %32 = sbr.rel (0) target = $region33
  $region32: #{infodiscriminator_forward.1} parent=0 // pred_region
    _
  $region33: #{infodiscriminator_forward.1} parent=0 // pred_fallthru
    _
  // Predicated region
  $region34: #{infodiscriminator_forward.1} parent=0 // pred_check
    _
  $region35: #{infodiscriminator_forward.1} parent=0 // pred_check_branch
    %34 = sbr.rel (0) target = $region37
  $region36: #{infodiscriminator_forward.1} parent=0 // pred_region
    _
  $region37: #{infodiscriminator_forward.1} parent=0 // pred_fallthru
    _
  // Predicated region
  $region38: #{infodiscriminator_forward.1} parent=0 // pred_check
    _
  $region39: #{infodiscriminator_forward.1} parent=0 // pred_check_branch
    %36 = sbr.rel (0) target = $region41
  $region40: #{infodiscriminator_forward.1} parent=0 // pred_region
    _
  $region41: #{infodiscriminator_forward.1} parent=0 // pred_fallthru
    _
  // Predicated region
  $region42: #{infodiscriminator_forward.1} parent=0 // pred_check
    _
  $region43: #{infodiscriminator_forward.1} parent=0 // pred_check_branch
    %38 = sbr.rel (0) target = $region45
  $region44: #{infodiscriminator_forward.1} parent=0 // pred_region
    _
  $region45: #{infodiscriminator_forward.1} parent=0 // pred_fallthru
    _
  // Predicated region
  $region46: #{infodiscriminator_forward.1} parent=0 // pred_check
    _
  $region47: #{infodiscriminator_forward.1} parent=0 // pred_check_branch
    %40 = sbr.rel (0) target = $region49
  $region48: #{infodiscriminator_forward.1} parent=0 // pred_region
    _
  $region49: #{infodiscriminator_forward.1} parent=0 // pred_fallthru
    _
  %v41 = vld [vmem:[%s0] sm:$0xff]
  %v42 = vld [vmem:[%s0 + $0x8] sm:$0xff]
  %v43 = vld [vmem:[%s0 + $0x10] sm:$0xff]
  %v44 = vld [vmem:[%s0 + $0x18] sm:$0xff]
  %v45 = vld [vmem:[%s0 + $0x20] sm:$0xff]
  %v46 = vld [vmem:[%s0 + $0x28] sm:$0xff]
  %v47 = vld [vmem:[%s0 + $0x30] sm:$0xff]
  %v48 = vld [vmem:[%s0 + $0x38] sm:$0xff]
  %v49 = vld [vmem:[%s0 + $0x40] sm:$0xff]
  %v50 = vld [vmem:[%s0 + $0x48] sm:$0xff]
  %v51 = vld [vmem:[%s0 + $0x50] sm:$0xff]
  %v52 = vld [vmem:[%s0 + $0x58] sm:$0xff]
  %v53 = vld [vmem:[%s0 + $0x60] sm:$0xff]
  %v54 = vld [vmem:[%s0 + $0x68] sm:$0xff]
  %v55 = vld [vmem:[%s0 + $0x70] sm:$0xff]
  %v56 = vld [vmem:[%s0 + $0x78] sm:$0xff]
  %v57 = vld [vmem:[%s1] sm:$0xff]
  %v58 = vld [vmem:[%s1 + $0x8] sm:$0xff]
  %v59 = vld [vmem:[%s1 + $0x10] sm:$0xff]
  %v60 = vld [vmem:[%s1 + $0x18] sm:$0xff]
  %v61 = vld [vmem:[%s1 + $0x20] sm:$0xff]
  %v62 = vld [vmem:[%s1 + $0x28] sm:$0xff]
  %v63 = vld [vmem:[%s2] sm:$0x1]
  %v64 = vld [vmem:[%s3] sm:$0x1]
  %79 = vrot.lane.b32.xlu0 %v42, 16
  %v80 = vpop.permute.xlu0 %79
  %81 = vrot.lane.b32.xlu0 %v43, 16
  %v82 = vpop.permute.xlu0 %81
  %83 = vrot.lane.b32.xlu0 %v44, 16
  %v84 = vpop.permute.xlu0 %83
  %85 = vrot.lane.b32.xlu0 %v45, 16
  %v86 = vpop.permute.xlu0 %85
  %87 = vrot.lane.b32.xlu0 %v46, 16
  %v88 = vpop.permute.xlu0 %87
  %89 = vrot.lane.b32.xlu0 %v47, 16
  %v90 = vpop.permute.xlu0 %89
  %91 = vrot.lane.b32.xlu0 %v48, 16
  %v92 = vpop.permute.xlu0 %91
  %93 = vrot.lane.b32.xlu0 %v49, 16
  %v94 = vpop.permute.xlu0 %93
  %95 = vrot.lane.b32.xlu0 %v50, 16
  %v96 = vpop.permute.xlu0 %95
  %97 = vrot.lane.b32.xlu0 %v51, 16
  %v98 = vpop.permute.xlu0 %97
  %99 = vrot.lane.b32.xlu0 %v52, 16
  %v100 = vpop.permute.xlu0 %99
  %101 = vrot.lane.b32.xlu0 %v53, 16
  %v102 = vpop.permute.xlu0 %101
  %103 = vrot.lane.b32.xlu0 %v54, 16
  %v104 = vpop.permute.xlu0 %103
  %105 = vrot.lane.b32.xlu0 %v55, 16
  %v106 = vpop.permute.xlu0 %105
  %122 = vrot.lane.b32.xlu0 %v43, 32
  %v123 = vpop.permute.xlu0 %122
  %124 = vrot.lane.b32.xlu0 %v44, 32
  %v125 = vpop.permute.xlu0 %124
  %126 = vrot.lane.b32.xlu0 %v45, 32
  %v127 = vpop.permute.xlu0 %126
  %128 = vrot.lane.b32.xlu0 %v46, 32
  %v129 = vpop.permute.xlu0 %128
  %130 = vrot.lane.b32.xlu0 %v47, 32
  %v131 = vpop.permute.xlu0 %130
  %132 = vrot.lane.b32.xlu0 %v48, 32
  %v133 = vpop.permute.xlu0 %132
  %134 = vrot.lane.b32.xlu0 %v49, 32
  %v135 = vpop.permute.xlu0 %134
  %136 = vrot.lane.b32.xlu0 %v50, 32
  %v137 = vpop.permute.xlu0 %136
  %138 = vrot.lane.b32.xlu0 %v51, 32
  %v139 = vpop.permute.xlu0 %138
  %140 = vrot.lane.b32.xlu0 %v52, 32
  %v141 = vpop.permute.xlu0 %140
  %142 = vrot.lane.b32.xlu0 %v53, 32
  %v143 = vpop.permute.xlu0 %142
  %144 = vrot.lane.b32.xlu0 %v54, 32
  %v145 = vpop.permute.xlu0 %144
  %146 = vrot.lane.b32.xlu0 %v55, 32
  %v147 = vpop.permute.xlu0 %146
  %148 = vrot.lane.b32.xlu0 %v56, 32
  %v149 = vpop.permute.xlu0 %148
  %vm164 = vcmask 130048
  %v165 = vsel %vm164, %v41, %v80
  %v166 = vsel %vm164, %v42, %v82
  %v167 = vsel %vm164, %v43, %v84
  %v168 = vsel %vm164, %v44, %v86
  %v169 = vsel %vm164, %v45, %v88
  %v170 = vsel %vm164, %v46, %v90
  %v171 = vsel %vm164, %v47, %v92
  %v172 = vsel %vm164, %v48, %v94
  %v173 = vsel %vm164, %v49, %v96
  %v174 = vsel %vm164, %v50, %v98
  %v175 = vsel %vm164, %v51, %v100
  %v176 = vsel %vm164, %v52, %v102
  %v177 = vsel %vm164, %v53, %v104
  %v178 = vsel %vm164, %v54, %v106
  %vm179 = vcmask 261120
  %v180 = vsel %vm179, %v165, %v123
  %v181 = vsel %vm179, %v166, %v125
  %v182 = vsel %vm179, %v167, %v127
  %v183 = vsel %vm179, %v168, %v129
  %v184 = vsel %vm179, %v169, %v131
  %v185 = vsel %vm179, %v170, %v133
  %v186 = vsel %vm179, %v171, %v135
  %v187 = vsel %vm179, %v172, %v137
  %v188 = vsel %vm179, %v173, %v139
  %v189 = vsel %vm179, %v174, %v141
  %v190 = vsel %vm179, %v175, %v143
  %v191 = vsel %vm179, %v176, %v145
  %v192 = vsel %vm179, %v177, %v147
  %v193 = vsel %vm179, %v178, %v149
  %vm194 = vcmask 392192
  %v196 = vsel %vm194, %v180, 0
  %v199 = vsel %vm194, %v181, 0
  %v202 = vsel %vm194, %v182, 0
  %v205 = vsel %vm194, %v183, 0
  %v208 = vsel %vm194, %v184, 0
  %v211 = vsel %vm194, %v185, 0
  %v214 = vsel %vm194, %v186, 0
  %v217 = vsel %vm194, %v187, 0
  %v220 = vsel %vm194, %v188, 0
  %v223 = vsel %vm194, %v189, 0
  %v226 = vsel %vm194, %v190, 0
  %v229 = vsel %vm194, %v191, 0
  %v232 = vsel %vm194, %v192, 0
  %v235 = vsel %vm194, %v193, 0
  %237 = vmatprep.subr.mxu0 0.0
  %238 = vmatpush1.msra.mxu0 0.0
  %239 = vmatprep.subr.mxu0 0.0
  %240 = vmatpush1.msra.mxu0 0.0
  %241 = vmatprep.subr.mxu0 0.0
  %242 = vmatpush1.msra.mxu0 0.0
  %243 = vmatprep.subr.mxu0 0.0
  %244 = vmatpush1.msra.mxu0 0.0
  %245 = vmatprep.subr.mxu0 0.0
  %246 = vmatpush1.msra.mxu0 0.0
  %247 = vmatprep.subr.mxu0 0.0
  %248 = vmatpush1.msra.mxu0 0.0
  %249 = vmatprep.subr.mxu0 0.0
  %250 = vmatpush1.msra.mxu0 0.0
  %251 = vmatprep.subr.mxu0 0.0
  %252 = vmatpush1.msra.mxu0 0.0
  %253 = vmatprep.subr.mxu0 0.0
  %254 = vmatpush1.msra.mxu0 0.0
  %255 = vmatprep.subr.mxu0 0.0
  %256 = vmatpush1.msra.mxu0 0.0
  %257 = vmatprep.subr.mxu0 0.0
  %258 = vmatpush1.msra.mxu0 %v62
  %259 = vmatprep.subr.mxu0 0.0
  %260 = vmatpush1.msra.mxu0 %v61
  %261 = vmatprep.subr.mxu0 0.0
  %262 = vmatpush1.msra.mxu0 %v60
  %263 = vmatprep.subr.mxu0 0.0
  %264 = vmatpush1.msra.mxu0 %v59
  %265 = vmatprep.subr.mxu0 0.0
  %266 = vmatpush1.msra.mxu0 %v58
  %267 = vmatprep.subr.mxu0 0.0
  %268 = vmatpush1.msra.mxu0 %v57
  %269 = vmatprep.subr.mxu0 0.0
  %270 = vmatpush2.msra.mxu0 0.0
  %271 = vmatprep.subr.mxu0 0.0
  %272 = vmatpush2.msra.mxu0 0.0
  %273 = vmatprep.subr.mxu0 0.0
  %274 = vmatpush2.msra.mxu0 0.0
  %275 = vmatprep.subr.mxu0 0.0
  %276 = vmatpush2.msra.mxu0 0.0
  %277 = vmatprep.subr.mxu0 0.0
  %278 = vmatpush2.msra.mxu0 0.0
  %279 = vmatprep.subr.mxu0 0.0
  %280 = vmatpush2.msra.mxu0 0.0
  %281 = vmatprep.subr.mxu0 0.0
  %282 = vmatpush2.msra.mxu0 0.0
  %283 = vmatprep.subr.mxu0 0.0
  %284 = vmatpush2.msra.mxu0 0.0
  %285 = vmatprep.subr.mxu0 0.0
  %286 = vmatpush2.msra.mxu0 0.0
  %287 = vmatprep.subr.mxu0 0.0
  %288 = vmatpush2.msra.mxu0 0.0
  %289 = vmatprep.subr.mxu0 0.0
  %290 = vmatpush2.msra.mxu0 0.0
  %291 = vmatprep.subr.mxu0 0.0
  %292 = vmatpush2.msra.mxu0 0.0
  %293 = vmatprep.subr.mxu0 0.0
  %294 = vmatpush2.msra.mxu0 0.0
  %295 = vmatprep.subr.mxu0 0.0
  %296 = vmatpush2.msra.mxu0 0.0
  %297 = vmatprep.subr.mxu0 0.0
  %298 = vmatpush2.msra.mxu0 0.0
  %299 = vmatprep.subr.mxu0 0.0
  %300 = vmatpush2.msra.mxu0 0.0
  %301 = vmatprep.mubr.f32.mxu0 0.0
  %302 = vmatmul.mubr.f32.gmra.mxu0 %v196
  %v303 = vpop.f32.mrf.mxu0
  %v304 = vadd.f32 0.0, %v303
  %v305 = vpop.f32.mrf.mxu0
  %306 = vmatprep.mubr.f32.mxu0 0.0
  %307 = vmatmul.mubr.f32.gmra.mxu0 %v199
  %v308 = vpop.f32.mrf.mxu0
  %v309 = vadd.f32 0.0, %v308
  %v310 = vpop.f32.mrf.mxu0
  %311 = vmatprep.mubr.f32.mxu0 0.0
  %312 = vmatmul.mubr.f32.gmra.mxu0 %v202
  %v313 = vpop.f32.mrf.mxu0
  %v314 = vadd.f32 0.0, %v313
  %v315 = vpop.f32.mrf.mxu0
  %316 = vmatprep.mubr.f32.mxu0 0.0
  %317 = vmatmul.mubr.f32.gmra.mxu0 %v205
  %v318 = vpop.f32.mrf.mxu0
  %v319 = vadd.f32 0.0, %v318
  %v320 = vpop.f32.mrf.mxu0
  %321 = vmatprep.mubr.f32.mxu0 0.0
  %322 = vmatmul.mubr.f32.gmra.mxu0 %v208
  %v323 = vpop.f32.mrf.mxu0
  %v324 = vadd.f32 0.0, %v323
  %v325 = vpop.f32.mrf.mxu0
  %326 = vmatprep.mubr.f32.mxu0 0.0
  %327 = vmatmul.mubr.f32.gmra.mxu0 %v211
  %v328 = vpop.f32.mrf.mxu0
  %v329 = vadd.f32 0.0, %v328
  %v330 = vpop.f32.mrf.mxu0
  %331 = vmatprep.mubr.f32.mxu0 0.0
  %332 = vmatmul.mubr.f32.gmra.mxu0 %v214
  %v333 = vpop.f32.mrf.mxu0
  %v334 = vadd.f32 0.0, %v333
  %v335 = vpop.f32.mrf.mxu0
  %336 = vmatprep.mubr.f32.mxu0 0.0
  %337 = vmatmul.mubr.f32.gmra.mxu0 %v217
  %v338 = vpop.f32.mrf.mxu0
  %v339 = vadd.f32 0.0, %v338
  %v340 = vpop.f32.mrf.mxu0
  %341 = vmatprep.mubr.f32.mxu0 0.0
  %342 = vmatmul.mubr.f32.gmra.mxu0 %v220
  %v343 = vpop.f32.mrf.mxu0
  %v344 = vadd.f32 0.0, %v343
  %v345 = vpop.f32.mrf.mxu0
  %346 = vmatprep.mubr.f32.mxu0 0.0
  %347 = vmatmul.mubr.f32.gmra.mxu0 %v223
  %v348 = vpop.f32.mrf.mxu0
  %v349 = vadd.f32 0.0, %v348
  %v350 = vpop.f32.mrf.mxu0
  %351 = vmatprep.mubr.f32.mxu0 0.0
  %352 = vmatmul.mubr.f32.gmra.mxu0 %v226
  %v353 = vpop.f32.mrf.mxu0
  %v354 = vadd.f32 0.0, %v353
  %v355 = vpop.f32.mrf.mxu0
  %356 = vmatprep.mubr.f32.mxu0 0.0
  %357 = vmatmul.mubr.f32.gmra.mxu0 %v229
  %v358 = vpop.f32.mrf.mxu0
  %v359 = vadd.f32 0.0, %v358
  %v360 = vpop.f32.mrf.mxu0
  %361 = vmatprep.mubr.f32.mxu0 0.0
  %362 = vmatmul.mubr.f32.gmra.mxu0 %v232
  %v363 = vpop.f32.mrf.mxu0
  %v364 = vadd.f32 0.0, %v363
  %v365 = vpop.f32.mrf.mxu0
  %366 = vmatprep.mubr.f32.mxu0 0.0
  %367 = vmatmul.mubr.f32.gmra.mxu0 %v235
  %v368 = vpop.f32.mrf.mxu0
  %v369 = vadd.f32 0.0, %v368
  %v370 = vpop.f32.mrf.mxu0
  %371 = vdwg.mxu0
  %v372 = vlaneseq
  %v373 = vshrl.u32 %v372, 7
  %vm374 = vcmp.lt.s32.totalorder %v373, 2
  %v375 = vsel %vm374, 1, 0
  %v376 = vcvt.s32.f32 %v375
  %vm377 = vcmask 916480
  %v378 = vsel %vm377, %v304, 0.0
  %v379 = vsel %vm377, %v309, 0.0
  %v380 = vadd.f32 %v378, %v379
  %v381 = vsel %vm377, %v314, 0.0
  %v382 = vadd.f32 %v380, %v381
  %v383 = vsel %vm377, %v319, 0.0
  %v384 = vadd.f32 %v382, %v383
  %v385 = vsel %vm377, %v324, 0.0
  %v386 = vadd.f32 %v384, %v385
  %v387 = vsel %vm377, %v329, 0.0
  %v388 = vadd.f32 %v386, %v387
  %v389 = vsel %vm377, %v334, 0.0
  %v390 = vadd.f32 %v388, %v389
  %v391 = vsel %vm377, %v339, 0.0
  %v392 = vadd.f32 %v390, %v391
  %v393 = vsel %vm377, %v344, 0.0
  %v394 = vadd.f32 %v392, %v393
  %v395 = vsel %vm377, %v349, 0.0
  %v396 = vadd.f32 %v394, %v395
  %v397 = vsel %vm377, %v354, 0.0
  %v398 = vadd.f32 %v396, %v397
  %v399 = vsel %vm377, %v359, 0.0
  %v400 = vadd.f32 %v398, %v399
  %v401 = vsel %vm377, %v364, 0.0
  %v402 = vadd.f32 %v400, %v401
  %v403 = vsel %vm377, %v369, 0.0
  %v404 = vadd.f32 %v402, %v403
  %v405 = vsel %vm377, %v404, 0.0
  %v406 = vrot.slane %v405, 4
  %v407 = vadd.f32 %v405, %v406
  %v408 = vrot.slane %v407, 2
  %v409 = vadd.f32 %v407, %v408
  %v410 = vrot.slane %v409, 1
  %v411 = vadd.f32 %v409, %v410
  %413 = vrot.lane.b32.xlu0 %v411, 120
  %v414 = vpop.permute.xlu0 %413
  %v416 = vadd.f32 %v411, %v414
  %417 = vrot.lane.b32.xlu0 %v411, 112
  %v418 = vpop.permute.xlu0 %417
  %v420 = vadd.f32 %v416, %v418
  %421 = vrot.lane.b32.xlu0 %v411, 104
  %v422 = vpop.permute.xlu0 %421
  %v424 = vadd.f32 %v420, %v422
  %425 = vrot.lane.b32.xlu0 %v411, 96
  %v426 = vpop.permute.xlu0 %425
  %v428 = vadd.f32 %v424, %v426
  %429 = vrot.lane.b32.xlu0 %v411, 88
  %v430 = vpop.permute.xlu0 %429
  %v432 = vadd.f32 %v428, %v430
  %433 = vrot.lane.b32.xlu0 %v411, 80
  %v434 = vpop.permute.xlu0 %433
  %v436 = vadd.f32 %v432, %v434
  %437 = vrot.lane.b32.xlu0 %v411, 72
  %v438 = vpop.permute.xlu0 %437
  %v440 = vadd.f32 %v436, %v438
  %441 = vrot.lane.b32.xlu0 %v411, 64
  %v442 = vpop.permute.xlu0 %441
  %v444 = vadd.f32 %v440, %v442
  %445 = vrot.lane.b32.xlu0 %v411, 56
  %v446 = vpop.permute.xlu0 %445
  %v448 = vadd.f32 %v444, %v446
  %449 = vrot.lane.b32.xlu0 %v411, 48
  %v450 = vpop.permute.xlu0 %449
  %v452 = vadd.f32 %v448, %v450
  %453 = vrot.lane.b32.xlu0 %v411, 40
  %v454 = vpop.permute.xlu0 %453
  %v456 = vadd.f32 %v452, %v454
  %457 = vrot.lane.b32.xlu0 %v411, 32
  %v458 = vpop.permute.xlu0 %457
  %v460 = vadd.f32 %v456, %v458
  %461 = vrot.lane.b32.xlu0 %v411, 24
  %v462 = vpop.permute.xlu0 %461
  %v464 = vadd.f32 %v460, %v462
  %v465 = vrcp.pop 392.0
  %v466 = vmul.f32 %v464, %v465
  %468 = vrot.lane.b32.xlu0 %v466, 8
  %v469 = vpop.permute.xlu0 %468
  %471 = vrot.lane.b32.xlu0 %v466, 16
  %v472 = vpop.permute.xlu0 %471
  %474 = vrot.lane.b32.xlu0 %v466, 24
  %v475 = vpop.permute.xlu0 %474
  %477 = vrot.lane.b32.xlu0 %v466, 32
  %v478 = vpop.permute.xlu0 %477
  %480 = vrot.lane.b32.xlu0 %v466, 40
  %v481 = vpop.permute.xlu0 %480
  %483 = vrot.lane.b32.xlu0 %v466, 48
  %v484 = vpop.permute.xlu0 %483
  %486 = vrot.lane.b32.xlu0 %v466, 56
  %v487 = vpop.permute.xlu0 %486
  %489 = vrot.lane.b32.xlu0 %v466, 64
  %v490 = vpop.permute.xlu0 %489
  %492 = vrot.lane.b32.xlu0 %v466, 72
  %v493 = vpop.permute.xlu0 %492
  %495 = vrot.lane.b32.xlu0 %v466, 80
  %v496 = vpop.permute.xlu0 %495
  %498 = vrot.lane.b32.xlu0 %v466, 88
  %v499 = vpop.permute.xlu0 %498
  %501 = vrot.lane.b32.xlu0 %v466, 96
  %v502 = vpop.permute.xlu0 %501
  %504 = vrot.lane.b32.xlu0 %v466, 104
  %v505 = vpop.permute.xlu0 %504
  %vm507 = vcmask 64512
  %v508 = vsel %vm507, %v466, %v469
  %v509 = vsel %vm164, %v508, %v472
  %vm510 = vcmask 195584
  %v511 = vsel %vm510, %v509, %v475
  %v512 = vsel %vm179, %v511, %v478
  %vm513 = vcmask 326656
  %v514 = vsel %vm513, %v512, %v481
  %v515 = vsel %vm194, %v514, %v484
  %vm516 = vcmask 457728
  %v517 = vsel %vm516, %v515, %v487
  %vm518 = vcmask 523264
  %v519 = vsel %vm518, %v517, %v490
  %vm520 = vcmask 588800
  %v521 = vsel %vm520, %v519, %v493
  %vm522 = vcmask 654336
  %v523 = vsel %vm522, %v521, %v496
  %vm524 = vcmask 719872
  %v525 = vsel %vm524, %v523, %v499
  %vm526 = vcmask 785408
  %v527 = vsel %vm526, %v525, %v502
  %vm528 = vcmask 850944
  %v529 = vsel %vm528, %v527, %v505
  %v530 = vlaneseq
  %v531 = vshrl.u32 %v530, 7
  %v532 = vsub.s32 0, %v531
  %v533 = vrot.slane %v529, %v532
  %v534 = vsub.f32 %v304, %v533
  %v535 = vsub.f32 %v309, %v533
  %v536 = vsub.f32 %v314, %v533
  %v537 = vsub.f32 %v319, %v533
  %v538 = vsub.f32 %v324, %v533
  %v539 = vsub.f32 %v329, %v533
  %v540 = vsub.f32 %v334, %v533
  %v541 = vsub.f32 %v339, %v533
  %v542 = vsub.f32 %v344, %v533
  %v543 = vsub.f32 %v349, %v533
  %v544 = vsub.f32 %v354, %v533
  %v545 = vsub.f32 %v359, %v533
  %v546 = vsub.f32 %v364, %v533
  %v547 = vsub.f32 %v369, %v533
  %v548 = vmul.f32 %v534, %v376
  %v549 = vmul.f32 %v535, %v376
  %v550 = vmul.f32 %v536, %v376
  %v551 = vmul.f32 %v537, %v376
  %v552 = vmul.f32 %v538, %v376
  %v553 = vmul.f32 %v539, %v376
  %v554 = vmul.f32 %v540, %v376
  %v555 = vmul.f32 %v541, %v376
  %v556 = vmul.f32 %v542, %v376
  %v557 = vmul.f32 %v543, %v376
  %v558 = vmul.f32 %v544, %v376
  %v559 = vmul.f32 %v545, %v376
  %v560 = vmul.f32 %v546, %v376
  %v561 = vmul.f32 %v547, %v376
  %v562 = vmul.f32 %v548, %v548
  %v563 = vmul.f32 %v549, %v549
  %v564 = vmul.f32 %v550, %v550
  %v565 = vmul.f32 %v551, %v551
  %v566 = vmul.f32 %v552, %v552
  %v567 = vmul.f32 %v553, %v553
  %v568 = vmul.f32 %v554, %v554
  %v569 = vmul.f32 %v555, %v555
  %v570 = vmul.f32 %v556, %v556
  %v571 = vmul.f32 %v557, %v557
  %v572 = vmul.f32 %v558, %v558
  %v573 = vmul.f32 %v559, %v559
  %v574 = vmul.f32 %v560, %v560
  %v575 = vmul.f32 %v561, %v561
  %v576 = vsel %vm377, %v562, 0.0
  %v577 = vsel %vm377, %v563, 0.0
  %v578 = vadd.f32 %v576, %v577
  %v579 = vsel %vm377, %v564, 0.0
  %v580 = vadd.f32 %v578, %v579
  %v581 = vsel %vm377, %v565, 0.0
  %v582 = vadd.f32 %v580, %v581
  %v583 = vsel %vm377, %v566, 0.0
  %v584 = vadd.f32 %v582, %v583
  %v585 = vsel %vm377, %v567, 0.0
  %v586 = vadd.f32 %v584, %v585
  %v587 = vsel %vm377, %v568, 0.0
  %v588 = vadd.f32 %v586, %v587
  %v589 = vsel %vm377, %v569, 0.0
  %v590 = vadd.f32 %v588, %v589
  %v591 = vsel %vm377, %v570, 0.0
  %v592 = vadd.f32 %v590, %v591
  %v593 = vsel %vm377, %v571, 0.0
  %v594 = vadd.f32 %v592, %v593
  %v595 = vsel %vm377, %v572, 0.0
  %v596 = vadd.f32 %v594, %v595
  %v597 = vsel %vm377, %v573, 0.0
  %v598 = vadd.f32 %v596, %v597
  %v599 = vsel %vm377, %v574, 0.0
  %v600 = vadd.f32 %v598, %v599
  %v601 = vsel %vm377, %v575, 0.0
  %v602 = vadd.f32 %v600, %v601
  %v603 = vsel %vm377, %v602, 0.0
  %v604 = vrot.slane %v603, 4
  %v605 = vadd.f32 %v603, %v604
  %v606 = vrot.slane %v605, 2
  %v607 = vadd.f32 %v605, %v606
  %v608 = vrot.slane %v607, 1
  %v609 = vadd.f32 %v607, %v608
  %611 = vrot.lane.b32.xlu0 %v609, 120
  %v612 = vpop.permute.xlu0 %611
  %v614 = vadd.f32 %v609, %v612
  %615 = vrot.lane.b32.xlu0 %v609, 112
  %v616 = vpop.permute.xlu0 %615
  %v618 = vadd.f32 %v614, %v616
  %619 = vrot.lane.b32.xlu0 %v609, 104
  %v620 = vpop.permute.xlu0 %619
  %v622 = vadd.f32 %v618, %v620
  %623 = vrot.lane.b32.xlu0 %v609, 96
  %v624 = vpop.permute.xlu0 %623
  %v626 = vadd.f32 %v622, %v624
  %627 = vrot.lane.b32.xlu0 %v609, 88
  %v628 = vpop.permute.xlu0 %627
  %v630 = vadd.f32 %v626, %v628
  %631 = vrot.lane.b32.xlu0 %v609, 80
  %v632 = vpop.permute.xlu0 %631
  %v634 = vadd.f32 %v630, %v632
  %635 = vrot.lane.b32.xlu0 %v609, 72
  %v636 = vpop.permute.xlu0 %635
  %v638 = vadd.f32 %v634, %v636
  %639 = vrot.lane.b32.xlu0 %v609, 64
  %v640 = vpop.permute.xlu0 %639
  %v642 = vadd.f32 %v638, %v640
  %643 = vrot.lane.b32.xlu0 %v609, 56
  %v644 = vpop.permute.xlu0 %643
  %v646 = vadd.f32 %v642, %v644
  %647 = vrot.lane.b32.xlu0 %v609, 48
  %v648 = vpop.permute.xlu0 %647
  %v650 = vadd.f32 %v646, %v648
  %651 = vrot.lane.b32.xlu0 %v609, 40
  %v652 = vpop.permute.xlu0 %651
  %v654 = vadd.f32 %v650, %v652
  %655 = vrot.lane.b32.xlu0 %v609, 32
  %v656 = vpop.permute.xlu0 %655
  %v658 = vadd.f32 %v654, %v656
  %659 = vrot.lane.b32.xlu0 %v609, 24
  %v660 = vpop.permute.xlu0 %659
  %v662 = vadd.f32 %v658, %v660
  %v663 = vmul.f32 %v662, %v465
  %665 = vrot.lane.b32.xlu0 %v663, 8
  %v666 = vpop.permute.xlu0 %665
  %668 = vrot.lane.b32.xlu0 %v663, 16
  %v669 = vpop.permute.xlu0 %668
  %671 = vrot.lane.b32.xlu0 %v663, 24
  %v672 = vpop.permute.xlu0 %671
  %674 = vrot.lane.b32.xlu0 %v663, 32
  %v675 = vpop.permute.xlu0 %674
  %677 = vrot.lane.b32.xlu0 %v663, 40
  %v678 = vpop.permute.xlu0 %677
  %680 = vrot.lane.b32.xlu0 %v663, 48
  %v681 = vpop.permute.xlu0 %680
  %683 = vrot.lane.b32.xlu0 %v663, 56
  %v684 = vpop.permute.xlu0 %683
  %686 = vrot.lane.b32.xlu0 %v663, 64
  %v687 = vpop.permute.xlu0 %686
  %689 = vrot.lane.b32.xlu0 %v663, 72
  %v690 = vpop.permute.xlu0 %689
  %692 = vrot.lane.b32.xlu0 %v663, 80
  %v693 = vpop.permute.xlu0 %692
  %695 = vrot.lane.b32.xlu0 %v663, 88
  %v696 = vpop.permute.xlu0 %695
  %698 = vrot.lane.b32.xlu0 %v663, 96
  %v699 = vpop.permute.xlu0 %698
  %701 = vrot.lane.b32.xlu0 %v663, 104
  %v702 = vpop.permute.xlu0 %701
  %v704 = vsel %vm507, %v663, %v666
  %v705 = vsel %vm164, %v704, %v669
  %v706 = vsel %vm510, %v705, %v672
  %v707 = vsel %vm179, %v706, %v675
  %v708 = vsel %vm513, %v707, %v678
  %v709 = vsel %vm194, %v708, %v681
  %v710 = vsel %vm516, %v709, %v684
  %v711 = vsel %vm518, %v710, %v687
  %v712 = vsel %vm520, %v711, %v690
  %v713 = vsel %vm522, %v712, %v693
  %v714 = vsel %vm524, %v713, %v696
  %v715 = vsel %vm526, %v714, %v699
  %v716 = vsel %vm528, %v715, %v702
  %v717 = vadd.f32 %v716, 1e-05
  %v718 = vrsqrt.pop %v717
  %v719 = vmul.f32 %v63, %v718
  %v721 = vlaneseq
  %v722 = vshrl.u32 %v721, 7
  %v723 = vsub.s32 0, %v722
  %v724 = vrot.slane %v719, %v723
  %v726 = vmul.f32 %v534, %v724
  %v727 = vmul.f32 %v535, %v724
  %v728 = vmul.f32 %v536, %v724
  %v729 = vmul.f32 %v537, %v724
  %v730 = vmul.f32 %v538, %v724
  %v731 = vmul.f32 %v539, %v724
  %v732 = vmul.f32 %v540, %v724
  %v733 = vmul.f32 %v541, %v724
  %v734 = vmul.f32 %v542, %v724
  %v735 = vmul.f32 %v543, %v724
  %v736 = vmul.f32 %v544, %v724
  %v737 = vmul.f32 %v545, %v724
  %v738 = vmul.f32 %v546, %v724
  %v739 = vmul.f32 %v547, %v724
  %v741 = vlaneseq
  %v742 = vshrl.u32 %v741, 7
  %v743 = vsub.s32 0, %v742
  %v744 = vrot.slane %v64, %v743
  %v746 = vadd.f32 %v726, %v744
  %v747 = vadd.f32 %v727, %v744
  %v748 = vadd.f32 %v728, %v744
  %v749 = vadd.f32 %v729, %v744
  %v750 = vadd.f32 %v730, %v744
  %v751 = vadd.f32 %v731, %v744
  %v752 = vadd.f32 %v732, %v744
  %v753 = vadd.f32 %v733, %v744
  %v754 = vadd.f32 %v734, %v744
  %v755 = vadd.f32 %v735, %v744
  %v756 = vadd.f32 %v736, %v744
  %v757 = vadd.f32 %v737, %v744
  %v758 = vadd.f32 %v738, %v744
  %v759 = vadd.f32 %v739, %v744
  %v760 = vmax.f32 %v746, 0.0
  %v761 = vmax.f32 %v747, 0.0
  %v762 = vmax.f32 %v748, 0.0
  %v763 = vmax.f32 %v749, 0.0
  %v764 = vmax.f32 %v750, 0.0
  %v765 = vmax.f32 %v751, 0.0
  %v766 = vmax.f32 %v752, 0.0
  %v767 = vmax.f32 %v753, 0.0
  %v768 = vmax.f32 %v754, 0.0
  %v769 = vmax.f32 %v755, 0.0
  %v770 = vmax.f32 %v756, 0.0
  %v771 = vmax.f32 %v757, 0.0
  %v772 = vmax.f32 %v758, 0.0
  %v773 = vmax.f32 %v759, 0.0
  %v774 = vmul.f32 %v760, %v376
  %v775 = vmul.f32 %v761, %v376
  %v776 = vmul.f32 %v762, %v376
  %v777 = vmul.f32 %v763, %v376
  %v778 = vmul.f32 %v764, %v376
  %v779 = vmul.f32 %v765, %v376
  %v780 = vmul.f32 %v766, %v376
  %v781 = vmul.f32 %v767, %v376
  %v782 = vmul.f32 %v768, %v376
  %v783 = vmul.f32 %v769, %v376
  %v784 = vmul.f32 %v770, %v376
  %v785 = vmul.f32 %v771, %v376
  %v786 = vmul.f32 %v772, %v376
  %v787 = vmul.f32 %v773, %v376
  %v788 = vmax.f32 %v774, %v775
  %v789 = vmax.f32 %v776, %v777
  %v790 = vmax.f32 %v778, %v779
  %v791 = vmax.f32 %v780, %v781
  %v792 = vmax.f32 %v782, %v783
  %v793 = vmax.f32 %v784, %v785
  %v794 = vmax.f32 %v786, %v787
  %802 = vrot.lane.b32.xlu0 %v788, 120
  %v803 = vpop.permute.xlu0 %802
  %804 = vrot.lane.b32.xlu0 %v789, 120
  %v805 = vpop.permute.xlu0 %804
  %806 = vrot.lane.b32.xlu0 %v790, 120
  %v807 = vpop.permute.xlu0 %806
  %808 = vrot.lane.b32.xlu0 %v791, 120
  %v809 = vpop.permute.xlu0 %808
  %810 = vrot.lane.b32.xlu0 %v792, 120
  %v811 = vpop.permute.xlu0 %810
  %812 = vrot.lane.b32.xlu0 %v793, 120
  %v813 = vpop.permute.xlu0 %812
  %814 = vrot.lane.b32.xlu0 %v794, 120
  %v815 = vpop.permute.xlu0 %814
  %v823 = vmax.f32 %v788, %v803
  %v824 = vmax.f32 %v789, %v805
  %v825 = vmax.f32 %v790, %v807
  %v826 = vmax.f32 %v791, %v809
  %v827 = vmax.f32 %v792, %v811
  %v828 = vmax.f32 %v793, %v813
  %v829 = vmax.f32 %v794, %v815
  %837 = vrot.lane.b32.xlu0 %v823, 120
  %v838 = vpop.permute.xlu0 %837
  %839 = vrot.lane.b32.xlu0 %v824, 120
  %v840 = vpop.permute.xlu0 %839
  %841 = vrot.lane.b32.xlu0 %v825, 120
  %v842 = vpop.permute.xlu0 %841
  %843 = vrot.lane.b32.xlu0 %v826, 120
  %v844 = vpop.permute.xlu0 %843
  %845 = vrot.lane.b32.xlu0 %v827, 120
  %v846 = vpop.permute.xlu0 %845
  %847 = vrot.lane.b32.xlu0 %v828, 120
  %v848 = vpop.permute.xlu0 %847
  %849 = vrot.lane.b32.xlu0 %v829, 120
  %v850 = vpop.permute.xlu0 %849
  %858 = vrot.lane.b32.xlu0 %v823, 112
  %v859 = vpop.permute.xlu0 %858
  %860 = vrot.lane.b32.xlu0 %v824, 112
  %v861 = vpop.permute.xlu0 %860
  %862 = vrot.lane.b32.xlu0 %v825, 112
  %v863 = vpop.permute.xlu0 %862
  %864 = vrot.lane.b32.xlu0 %v826, 112
  %v865 = vpop.permute.xlu0 %864
  %866 = vrot.lane.b32.xlu0 %v827, 112
  %v867 = vpop.permute.xlu0 %866
  %868 = vrot.lane.b32.xlu0 %v828, 112
  %v869 = vpop.permute.xlu0 %868
  %870 = vrot.lane.b32.xlu0 %v829, 112
  %v871 = vpop.permute.xlu0 %870
  %879 = vrot.lane.b32.xlu0 %v823, 104
  %v880 = vpop.permute.xlu0 %879
  %881 = vrot.lane.b32.xlu0 %v824, 104
  %v882 = vpop.permute.xlu0 %881
  %883 = vrot.lane.b32.xlu0 %v825, 104
  %v884 = vpop.permute.xlu0 %883
  %885 = vrot.lane.b32.xlu0 %v826, 104
  %v886 = vpop.permute.xlu0 %885
  %887 = vrot.lane.b32.xlu0 %v827, 104
  %v888 = vpop.permute.xlu0 %887
  %889 = vrot.lane.b32.xlu0 %v828, 104
  %v890 = vpop.permute.xlu0 %889
  %891 = vrot.lane.b32.xlu0 %v829, 104
  %v892 = vpop.permute.xlu0 %891
  %900 = vrot.lane.b32.xlu0 %v823, 96
  %v901 = vpop.permute.xlu0 %900
  %902 = vrot.lane.b32.xlu0 %v824, 96
  %v903 = vpop.permute.xlu0 %902
  %904 = vrot.lane.b32.xlu0 %v825, 96
  %v905 = vpop.permute.xlu0 %904
  %906 = vrot.lane.b32.xlu0 %v826, 96
  %v907 = vpop.permute.xlu0 %906
  %908 = vrot.lane.b32.xlu0 %v827, 96
  %v909 = vpop.permute.xlu0 %908
  %910 = vrot.lane.b32.xlu0 %v828, 96
  %v911 = vpop.permute.xlu0 %910
  %912 = vrot.lane.b32.xlu0 %v829, 96
  %v913 = vpop.permute.xlu0 %912
  %921 = vrot.lane.b32.xlu0 %v823, 88
  %v922 = vpop.permute.xlu0 %921
  %923 = vrot.lane.b32.xlu0 %v824, 88
  %v924 = vpop.permute.xlu0 %923
  %925 = vrot.lane.b32.xlu0 %v825, 88
  %v926 = vpop.permute.xlu0 %925
  %927 = vrot.lane.b32.xlu0 %v826, 88
  %v928 = vpop.permute.xlu0 %927
  %929 = vrot.lane.b32.xlu0 %v827, 88
  %v930 = vpop.permute.xlu0 %929
  %931 = vrot.lane.b32.xlu0 %v828, 88
  %v932 = vpop.permute.xlu0 %931
  %933 = vrot.lane.b32.xlu0 %v829, 88
  %v934 = vpop.permute.xlu0 %933
  %942 = vrot.lane.b32.xlu0 %v823, 80
  %v943 = vpop.permute.xlu0 %942
  %944 = vrot.lane.b32.xlu0 %v824, 80
  %v945 = vpop.permute.xlu0 %944
  %946 = vrot.lane.b32.xlu0 %v825, 80
  %v947 = vpop.permute.xlu0 %946
  %948 = vrot.lane.b32.xlu0 %v826, 80
  %v949 = vpop.permute.xlu0 %948
  %950 = vrot.lane.b32.xlu0 %v827, 80
  %v951 = vpop.permute.xlu0 %950
  %952 = vrot.lane.b32.xlu0 %v828, 80
  %v953 = vpop.permute.xlu0 %952
  %954 = vrot.lane.b32.xlu0 %v829, 80
  %v955 = vpop.permute.xlu0 %954
  %v963 = vsel %vm507, %v823, %v838
  %v964 = vsel %vm507, %v824, %v840
  %v965 = vsel %vm507, %v825, %v842
  %v966 = vsel %vm507, %v826, %v844
  %v967 = vsel %vm507, %v827, %v846
  %v968 = vsel %vm507, %v828, %v848
  %v969 = vsel %vm507, %v829, %v850
  %v970 = vsel %vm164, %v963, %v859
  %v971 = vsel %vm164, %v964, %v861
  %v972 = vsel %vm164, %v965, %v863
  %v973 = vsel %vm164, %v966, %v865
  %v974 = vsel %vm164, %v967, %v867
  %v975 = vsel %vm164, %v968, %v869
  %v976 = vsel %vm164, %v969, %v871
  %v977 = vsel %vm510, %v970, %v880
  %v978 = vsel %vm510, %v971, %v882
  %v979 = vsel %vm510, %v972, %v884
  %v980 = vsel %vm510, %v973, %v886
  %v981 = vsel %vm510, %v974, %v888
  %v982 = vsel %vm510, %v975, %v890
  %v983 = vsel %vm510, %v976, %v892
  %v984 = vsel %vm179, %v977, %v901
  %v985 = vsel %vm179, %v978, %v903
  %v986 = vsel %vm179, %v979, %v905
  %v987 = vsel %vm179, %v980, %v907
  %v988 = vsel %vm179, %v981, %v909
  %v989 = vsel %vm179, %v982, %v911
  %v990 = vsel %vm179, %v983, %v913
  %v991 = vsel %vm513, %v984, %v922
  %v992 = vsel %vm513, %v985, %v924
  %v993 = vsel %vm513, %v986, %v926
  %v994 = vsel %vm513, %v987, %v928
  %v995 = vsel %vm513, %v988, %v930
  %v996 = vsel %vm513, %v989, %v932
  %v997 = vsel %vm513, %v990, %v934
  %v998 = vsel %vm194, %v991, %v943
  %v999 = vsel %vm194, %v992, %v945
  %v1000 = vsel %vm194, %v993, %v947
  %v1001 = vsel %vm194, %v994, %v949
  %v1002 = vsel %vm194, %v995, %v951
  %v1003 = vsel %vm194, %v996, %v953
  %v1004 = vsel %vm194, %v997, %v955
  %v1005 = vld [vmem:[%s4] sm:$0xff]
  %v1006 = vld [vmem:[%s4 + $0x8] sm:$0xff]
  %v1007 = vld [vmem:[%s4 + $0x10] sm:$0xff]
  %v1008 = vld [vmem:[%s4 + $0x18] sm:$0xff]
  %v1009 = vld [vmem:[%s4 + $0x20] sm:$0xff]
  %v1010 = vld [vmem:[%s4 + $0x28] sm:$0xff]
  %v1011 = vld [vmem:[%s4 + $0x30] sm:$0xff]
  %v1012 = vld [vmem:[%s4 + $0x38] sm:$0xff]
  %v1013 = vld [vmem:[%s4 + $0x40] sm:$0xff]
  %v1014 = vld [vmem:[%s4 + $0x48] sm:$0xff]
  %v1015 = vld [vmem:[%s4 + $0x50] sm:$0xff]
  %v1016 = vld [vmem:[%s4 + $0x58] sm:$0xff]
  %v1017 = vld [vmem:[%s4 + $0x60] sm:$0xff]
  %v1018 = vld [vmem:[%s4 + $0x68] sm:$0xff]
  %v1019 = vld [vmem:[%s4 + $0x70] sm:$0xff]
  %v1020 = vld [vmem:[%s4 + $0x78] sm:$0xff]
  %v1021 = vld [vmem:[%s4 + $0x80] sm:$0xff]
  %v1022 = vld [vmem:[%s4 + $0x88] sm:$0xff]
  %v1023 = vld [vmem:[%s4 + $0x90] sm:$0xff]
  %v1024 = vld [vmem:[%s4 + $0x98] sm:$0xff]
  %v1025 = vld [vmem:[%s4 + $0xa0] sm:$0xff]
  %v1026 = vld [vmem:[%s5] sm:$0x1]
  %v1027 = vld [vmem:[%s6] sm:$0x1]
  %1033 = vrot.lane.b32.xlu0 %v999, 56
  %v1034 = vpop.permute.xlu0 %1033
  %1035 = vrot.lane.b32.xlu0 %v1000, 56
  %v1036 = vpop.permute.xlu0 %1035
  %1037 = vrot.lane.b32.xlu0 %v1001, 56
  %v1038 = vpop.permute.xlu0 %1037
  %1039 = vrot.lane.b32.xlu0 %v1002, 56
  %v1040 = vpop.permute.xlu0 %1039
  %1041 = vrot.lane.b32.xlu0 %v1003, 56
  %v1042 = vpop.permute.xlu0 %1041
  %1049 = vrot.lane.b32.xlu0 %v1000, 112
  %v1050 = vpop.permute.xlu0 %1049
  %1051 = vrot.lane.b32.xlu0 %v1001, 112
  %v1052 = vpop.permute.xlu0 %1051
  %1053 = vrot.lane.b32.xlu0 %v1002, 112
  %v1054 = vpop.permute.xlu0 %1053
  %1055 = vrot.lane.b32.xlu0 %v1003, 112
  %v1056 = vpop.permute.xlu0 %1055
  %1057 = vrot.lane.b32.xlu0 %v1004, 112
  %v1058 = vpop.permute.xlu0 %1057
  %v1064 = vsel %vm516, %v998, %v1034
  %v1065 = vsel %vm516, %v999, %v1036
  %v1066 = vsel %vm516, %v1000, %v1038
  %v1067 = vsel %vm516, %v1001, %v1040
  %v1068 = vsel %vm516, %v1002, %v1042
  %v1069 = vsel %vm377, %v1064, %v1050
  %v1070 = vsel %vm377, %v1065, %v1052
  %v1071 = vsel %vm377, %v1066, %v1054
  %v1072 = vsel %vm377, %v1067, %v1056
  %v1073 = vsel %vm377, %v1068, %v1058
  %v1074 = vsel %vm513, %v1050, 0
  %v1076 = vsel %vm513, %v1052, 0
  %v1078 = vsel %vm513, %v1054, 0
  %v1080 = vsel %vm513, %v1056, 0
  %v1082 = vsel %vm513, %v1058, 0
  %1084 = vmatprep.subr.mxu0 0.0
  %1085 = vmatpush1.msra.mxu0 %v1020
  %1086 = vmatprep.subr.mxu0 0.0
  %1087 = vmatpush1.msra.mxu0 %v1019
  %1088 = vmatprep.subr.mxu0 0.0
  %1089 = vmatpush1.msra.mxu0 %v1018
  %1090 = vmatprep.subr.mxu0 0.0
  %1091 = vmatpush1.msra.mxu0 %v1017
  %1092 = vmatprep.subr.mxu0 0.0
  %1093 = vmatpush1.msra.mxu0 %v1016
  %1094 = vmatprep.subr.mxu0 0.0
  %1095 = vmatpush1.msra.mxu0 %v1015
  %1096 = vmatprep.subr.mxu0 0.0
  %1097 = vmatpush1.msra.mxu0 %v1014
  %1098 = vmatprep.subr.mxu0 0.0
  %1099 = vmatpush1.msra.mxu0 %v1013
  %1100 = vmatprep.subr.mxu0 0.0
  %1101 = vmatpush1.msra.mxu0 %v1012
  %1102 = vmatprep.subr.mxu0 0.0
  %1103 = vmatpush1.msra.mxu0 %v1011
  %1104 = vmatprep.subr.mxu0 0.0
  %1105 = vmatpush1.msra.mxu0 %v1010
  %1106 = vmatprep.subr.mxu0 0.0
  %1107 = vmatpush1.msra.mxu0 %v1009
  %1108 = vmatprep.subr.mxu0 0.0
  %1109 = vmatpush1.msra.mxu0 %v1008
  %1110 = vmatprep.subr.mxu0 0.0
  %1111 = vmatpush1.msra.mxu0 %v1007
  %1112 = vmatprep.subr.mxu0 0.0
  %1113 = vmatpush1.msra.mxu0 %v1006
  %1114 = vmatprep.subr.mxu0 0.0
  %1115 = vmatpush1.msra.mxu0 %v1005
  %1116 = vmatprep.subr.mxu0 0.0
  %1117 = vmatpush2.msra.mxu0 0.0
  %1118 = vmatprep.subr.mxu0 0.0
  %1119 = vmatpush2.msra.mxu0 0.0
  %1120 = vmatprep.subr.mxu0 0.0
  %1121 = vmatpush2.msra.mxu0 0.0
  %1122 = vmatprep.subr.mxu0 0.0
  %1123 = vmatpush2.msra.mxu0 0.0
  %1124 = vmatprep.subr.mxu0 0.0
  %1125 = vmatpush2.msra.mxu0 0.0
  %1126 = vmatprep.subr.mxu0 0.0
  %1127 = vmatpush2.msra.mxu0 0.0
  %1128 = vmatprep.subr.mxu0 0.0
  %1129 = vmatpush2.msra.mxu0 0.0
  %1130 = vmatprep.subr.mxu0 0.0
  %1131 = vmatpush2.msra.mxu0 0.0
  %1132 = vmatprep.subr.mxu0 0.0
  %1133 = vmatpush2.msra.mxu0 0.0
  %1134 = vmatprep.subr.mxu0 0.0
  %1135 = vmatpush2.msra.mxu0 0.0
  %1136 = vmatprep.subr.mxu0 0.0
  %1137 = vmatpush2.msra.mxu0 0.0
  %1138 = vmatprep.subr.mxu0 0.0
  %1139 = vmatpush2.msra.mxu0 %v1025
  %1140 = vmatprep.subr.mxu0 0.0
  %1141 = vmatpush2.msra.mxu0 %v1024
  %1142 = vmatprep.subr.mxu0 0.0
  %1143 = vmatpush2.msra.mxu0 %v1023
  %1144 = vmatprep.subr.mxu0 0.0
  %1145 = vmatpush2.msra.mxu0 %v1022
  %1146 = vmatprep.subr.mxu0 0.0
  %1147 = vmatpush2.msra.mxu0 %v1021
  %1148 = vmatprep.mubr.f32.mxu0 %v1074
  %1149 = vmatmul.mubr.f32.gmra.mxu0 %v1069
  %v1150 = vpop.f32.mrf.mxu0
  %v1151 = vadd.f32 0.0, %v1150
  %v1152 = vpop.f32.mrf.mxu0
  %1153 = vmatprep.mubr.f32.mxu0 %v1076
  %1154 = vmatmul.mubr.f32.gmra.mxu0 %v1070
  %v1155 = vpop.f32.mrf.mxu0
  %v1156 = vadd.f32 0.0, %v1155
  %v1157 = vpop.f32.mrf.mxu0
  %1158 = vmatprep.mubr.f32.mxu0 %v1078
  %1159 = vmatmul.mubr.f32.gmra.mxu0 %v1071
  %v1160 = vpop.f32.mrf.mxu0
  %v1161 = vadd.f32 0.0, %v1160
  %v1162 = vpop.f32.mrf.mxu0
  %1163 = vmatprep.mubr.f32.mxu0 %v1080
  %1164 = vmatmul.mubr.f32.gmra.mxu0 %v1072
  %v1165 = vpop.f32.mrf.mxu0
  %v1166 = vadd.f32 0.0, %v1165
  %v1167 = vpop.f32.mrf.mxu0
  %1168 = vmatprep.mubr.f32.mxu0 %v1082
  %1169 = vmatmul.mubr.f32.gmra.mxu0 %v1073
  %v1170 = vpop.f32.mrf.mxu0
  %v1171 = vadd.f32 0.0, %v1170
  %v1172 = vpop.f32.mrf.mxu0
  %1173 = vdwg.mxu0
  %v1174 = vsel %vm522, %v1151, 0.0
  %v1175 = vsel %vm522, %v1156, 0.0
  %v1176 = vadd.f32 %v1174, %v1175
  %v1177 = vsel %vm522, %v1161, 0.0
  %v1178 = vadd.f32 %v1176, %v1177
  %v1179 = vsel %vm522, %v1166, 0.0
  %v1180 = vadd.f32 %v1178, %v1179
  %v1181 = vsel %vm522, %v1171, 0.0
  %v1182 = vadd.f32 %v1180, %v1181
  %v1183 = vsel %vm522, %v1182, 0.0
  %v1184 = vrot.slane %v1183, 4
  %v1185 = vadd.f32 %v1183, %v1184
  %v1186 = vrot.slane %v1185, 2
  %v1187 = vadd.f32 %v1185, %v1186
  %v1188 = vrot.slane %v1187, 1
  %v1189 = vadd.f32 %v1187, %v1188
  %1191 = vrot.lane.b32.xlu0 %v1189, 112
  %v1192 = vpop.permute.xlu0 %1191
  %v1194 = vadd.f32 %v1189, %v1192
  %1195 = vrot.lane.b32.xlu0 %v1189, 96
  %v1196 = vpop.permute.xlu0 %1195
  %v1198 = vadd.f32 %v1194, %v1196
  %1199 = vrot.lane.b32.xlu0 %v1189, 80
  %v1200 = vpop.permute.xlu0 %1199
  %v1202 = vadd.f32 %v1198, %v1200
  %1203 = vrot.lane.b32.xlu0 %v1189, 64
  %v1204 = vpop.permute.xlu0 %1203
  %v1206 = vadd.f32 %v1202, %v1204
  %v1207 = vrcp.pop 50.0
  %v1208 = vmul.f32 %v1206, %v1207
  %1210 = vrot.lane.b32.xlu0 %v1208, 16
  %v1211 = vpop.permute.xlu0 %1210
  %1213 = vrot.lane.b32.xlu0 %v1208, 32
  %v1214 = vpop.permute.xlu0 %1213
  %1216 = vrot.lane.b32.xlu0 %v1208, 48
  %v1217 = vpop.permute.xlu0 %1216
  %1219 = vrot.lane.b32.xlu0 %v1208, 64
  %v1220 = vpop.permute.xlu0 %1219
  %v1222 = vsel %vm164, %v1208, %v1211
  %v1223 = vsel %vm179, %v1222, %v1214
  %v1224 = vsel %vm194, %v1223, %v1217
  %v1225 = vsel %vm518, %v1224, %v1220
  %v1226 = vlaneseq
  %v1227 = vshrl.u32 %v1226, 7
  %v1228 = vsub.s32 0, %v1227
  %v1229 = vrot.slane %v1225, %v1228
  %v1230 = vsub.f32 %v1151, %v1229
  %v1231 = vsub.f32 %v1156, %v1229
  %v1232 = vsub.f32 %v1161, %v1229
  %v1233 = vsub.f32 %v1166, %v1229
  %v1234 = vsub.f32 %v1171, %v1229
  %v1235 = vmul.f32 %v1230, %v376
  %v1236 = vmul.f32 %v1231, %v376
  %v1237 = vmul.f32 %v1232, %v376
  %v1238 = vmul.f32 %v1233, %v376
  %v1239 = vmul.f32 %v1234, %v376
  %v1240 = vmul.f32 %v1235, %v1235
  %v1241 = vmul.f32 %v1236, %v1236
  %v1242 = vmul.f32 %v1237, %v1237
  %v1243 = vmul.f32 %v1238, %v1238
  %v1244 = vmul.f32 %v1239, %v1239
  %v1245 = vsel %vm522, %v1240, 0.0
  %v1246 = vsel %vm522, %v1241, 0.0
  %v1247 = vadd.f32 %v1245, %v1246
  %v1248 = vsel %vm522, %v1242, 0.0
  %v1249 = vadd.f32 %v1247, %v1248
  %v1250 = vsel %vm522, %v1243, 0.0
  %v1251 = vadd.f32 %v1249, %v1250
  %v1252 = vsel %vm522, %v1244, 0.0
  %v1253 = vadd.f32 %v1251, %v1252
  %v1254 = vsel %vm522, %v1253, 0.0
  %v1255 = vrot.slane %v1254, 4
  %v1256 = vadd.f32 %v1254, %v1255
  %v1257 = vrot.slane %v1256, 2
  %v1258 = vadd.f32 %v1256, %v1257
  %v1259 = vrot.slane %v1258, 1
  %v1260 = vadd.f32 %v1258, %v1259
  %1262 = vrot.lane.b32.xlu0 %v1260, 112
  %v1263 = vpop.permute.xlu0 %1262
  %v1265 = vadd.f32 %v1260, %v1263
  %1266 = vrot.lane.b32.xlu0 %v1260, 96
  %v1267 = vpop.permute.xlu0 %1266
  %v1269 = vadd.f32 %v1265, %v1267
  %1270 = vrot.lane.b32.xlu0 %v1260, 80
  %v1271 = vpop.permute.xlu0 %1270
  %v1273 = vadd.f32 %v1269, %v1271
  %1274 = vrot.lane.b32.xlu0 %v1260, 64
  %v1275 = vpop.permute.xlu0 %1274
  %v1277 = vadd.f32 %v1273, %v1275
  %v1278 = vmul.f32 %v1277, %v1207
  %1280 = vrot.lane.b32.xlu0 %v1278, 16
  %v1281 = vpop.permute.xlu0 %1280
  %1283 = vrot.lane.b32.xlu0 %v1278, 32
  %v1284 = vpop.permute.xlu0 %1283
  %1286 = vrot.lane.b32.xlu0 %v1278, 48
  %v1287 = vpop.permute.xlu0 %1286
  %1289 = vrot.lane.b32.xlu0 %v1278, 64
  %v1290 = vpop.permute.xlu0 %1289
  %v1292 = vsel %vm164, %v1278, %v1281
  %v1293 = vsel %vm179, %v1292, %v1284
  %v1294 = vsel %vm194, %v1293, %v1287
  %v1295 = vsel %vm518, %v1294, %v1290
  %v1296 = vadd.f32 %v1295, 1e-05
  %v1297 = vrsqrt.pop %v1296
  %v1298 = vmul.f32 %v1026, %v1297
  %v1300 = vlaneseq
  %v1301 = vshrl.u32 %v1300, 7
  %v1302 = vsub.s32 0, %v1301
  %v1303 = vrot.slane %v1298, %v1302
  %v1305 = vmul.f32 %v1230, %v1303
  %v1306 = vmul.f32 %v1231, %v1303
  %v1307 = vmul.f32 %v1232, %v1303
  %v1308 = vmul.f32 %v1233, %v1303
  %v1309 = vmul.f32 %v1234, %v1303
  %v1311 = vlaneseq
  %v1312 = vshrl.u32 %v1311, 7
  %v1313 = vsub.s32 0, %v1312
  %v1314 = vrot.slane %v1027, %v1313
  %v1316 = vadd.f32 %v1305, %v1314
  %v1317 = vadd.f32 %v1306, %v1314
  %v1318 = vadd.f32 %v1307, %v1314
  %v1319 = vadd.f32 %v1308, %v1314
  %v1320 = vadd.f32 %v1309, %v1314
  %v1321 = vmax.f32 %v1316, 0.0
  %v1322 = vmax.f32 %v1317, 0.0
  %v1323 = vmax.f32 %v1318, 0.0
  %v1324 = vmax.f32 %v1319, 0.0
  %v1325 = vmax.f32 %v1320, 0.0
  %v1326 = vmul.f32 %v1321, %v376
  %v1327 = vmul.f32 %v1322, %v376
  %v1328 = vmul.f32 %v1323, %v376
  %v1329 = vmul.f32 %v1324, %v376
  %v1330 = vmul.f32 %v1325, %v376
  %v1331 = vld [vmem:[%s7] sm:$0xff]
  %v1332 = vld [vmem:[%s7 + $0x8] sm:$0xff]
  %v1333 = vld [vmem:[%s7 + $0x10] sm:$0xff]
  %v1334 = vld [vmem:[%s7 + $0x18] sm:$0xff]
  %v1335 = vld [vmem:[%s7 + $0x20] sm:$0xff]
  %v1336 = vld [vmem:[%s7 + $0x28] sm:$0xff]
  %v1337 = vld [vmem:[%s7 + $0x30] sm:$0xff]
  %v1338 = vld [vmem:[%s7 + $0x38] sm:$0xff]
  %v1339 = vld [vmem:[%s7 + $0x40] sm:$0xff]
  %v1340 = vld [vmem:[%s7 + $0x48] sm:$0xff]
  %s1341 = scalar_lea.vmem %s7, 80
  %v1342 = vld [vmem:[%s1341] sm:$0xff]
  %v1343 = vld [vmem:[%s1341 + $0x8] sm:$0xff]
  %v1344 = vld [vmem:[%s1341 + $0x10] sm:$0xff]
  %v1345 = vld [vmem:[%s1341 + $0x18] sm:$0xff]
  %v1346 = vld [vmem:[%s1341 + $0x20] sm:$0xff]
  %v1347 = vld [vmem:[%s1341 + $0x28] sm:$0xff]
  %v1348 = vld [vmem:[%s1341 + $0x30] sm:$0xff]
  %v1349 = vld [vmem:[%s1341 + $0x38] sm:$0xff]
  %v1350 = vld [vmem:[%s1341 + $0x40] sm:$0xff]
  %v1351 = vld [vmem:[%s1341 + $0x48] sm:$0xff]
  %v1353 = vsel %vm522, %v1327, 0
  %1355 = vmatprep.subr.mxu0 0.0
  %1356 = vmatpush1.msra.mxu0 0.0
  %1357 = vmatprep.subr.mxu0 0.0
  %1358 = vmatpush1.msra.mxu0 0.0
  %1359 = vmatprep.subr.mxu0 0.0
  %1360 = vmatpush1.msra.mxu0 0.0
  %1361 = vmatprep.subr.mxu0 0.0
  %1362 = vmatpush1.msra.mxu0 0.0
  %1363 = vmatprep.subr.mxu0 0.0
  %1364 = vmatpush1.msra.mxu0 0.0
  %1365 = vmatprep.subr.mxu0 0.0
  %1366 = vmatpush1.msra.mxu0 0.0
  %1367 = vmatprep.subr.mxu0 0.0
  %1368 = vmatpush1.msra.mxu0 %v1351
  %1369 = vmatprep.subr.mxu0 0.0
  %1370 = vmatpush1.msra.mxu0 %v1350
  %1371 = vmatprep.subr.mxu0 0.0
  %1372 = vmatpush1.msra.mxu0 %v1349
  %1373 = vmatprep.subr.mxu0 0.0
  %1374 = vmatpush1.msra.mxu0 %v1348
  %1375 = vmatprep.subr.mxu0 0.0
  %1376 = vmatpush1.msra.mxu0 %v1347
  %1377 = vmatprep.subr.mxu0 0.0
  %1378 = vmatpush1.msra.mxu0 %v1346
  %1379 = vmatprep.subr.mxu0 0.0
  %1380 = vmatpush1.msra.mxu0 %v1345
  %1381 = vmatprep.subr.mxu0 0.0
  %1382 = vmatpush1.msra.mxu0 %v1344
  %1383 = vmatprep.subr.mxu0 0.0
  %1384 = vmatpush1.msra.mxu0 %v1343
  %1385 = vmatprep.subr.mxu0 0.0
  %1386 = vmatpush1.msra.mxu0 %v1342
  %1387 = vmatprep.subr.mxu0 0.0
  %1388 = vmatpush2.msra.mxu0 0.0
  %1389 = vmatprep.subr.mxu0 0.0
  %1390 = vmatpush2.msra.mxu0 0.0
  %1391 = vmatprep.subr.mxu0 0.0
  %1392 = vmatpush2.msra.mxu0 0.0
  %1393 = vmatprep.subr.mxu0 0.0
  %1394 = vmatpush2.msra.mxu0 0.0
  %1395 = vmatprep.subr.mxu0 0.0
  %1396 = vmatpush2.msra.mxu0 0.0
  %1397 = vmatprep.subr.mxu0 0.0
  %1398 = vmatpush2.msra.mxu0 0.0
  %1399 = vmatprep.subr.mxu0 0.0
  %1400 = vmatpush2.msra.mxu0 0.0
  %1401 = vmatprep.subr.mxu0 0.0
  %1402 = vmatpush2.msra.mxu0 0.0
  %1403 = vmatprep.subr.mxu0 0.0
  %1404 = vmatpush2.msra.mxu0 0.0
  %1405 = vmatprep.subr.mxu0 0.0
  %1406 = vmatpush2.msra.mxu0 0.0
  %1407 = vmatprep.subr.mxu0 0.0
  %1408 = vmatpush2.msra.mxu0 0.0
  %1409 = vmatprep.subr.mxu0 0.0
  %1410 = vmatpush2.msra.mxu0 0.0
  %1411 = vmatprep.subr.mxu0 0.0
  %1412 = vmatpush2.msra.mxu0 0.0
  %1413 = vmatprep.subr.mxu0 0.0
  %1414 = vmatpush2.msra.mxu0 0.0
  %1415 = vmatprep.subr.mxu0 0.0
  %1416 = vmatpush2.msra.mxu0 0.0
  %1417 = vmatprep.subr.mxu0 0.0
  %1418 = vmatpush2.msra.mxu0 0.0
  %1419 = vmatprep.mubr.f32.mxu0 0.0
  %1420 = vmatmul.mubr.f32.gmra.mxu0 %v1353
  %v1421 = vpop.f32.mrf.mxu0
  %v1422 = vadd.f32 0.0, %v1421
  %v1423 = vpop.f32.mrf.mxu0
  %1424 = vdwg.mxu0
  %v1426 = vsel %vm522, %v1326, 0
  %1428 = vmatprep.subr.mxu0 0.0
  %1429 = vmatpush1.msra.mxu0 0.0
  %1430 = vmatprep.subr.mxu0 0.0
  %1431 = vmatpush1.msra.mxu0 0.0
  %1432 = vmatprep.subr.mxu0 0.0
  %1433 = vmatpush1.msra.mxu0 0.0
  %1434 = vmatprep.subr.mxu0 0.0
  %1435 = vmatpush1.msra.mxu0 0.0
  %1436 = vmatprep.subr.mxu0 0.0
  %1437 = vmatpush1.msra.mxu0 0.0
  %1438 = vmatprep.subr.mxu0 0.0
  %1439 = vmatpush1.msra.mxu0 0.0
  %1440 = vmatprep.subr.mxu0 0.0
  %1441 = vmatpush1.msra.mxu0 %v1340
  %1442 = vmatprep.subr.mxu0 0.0
  %1443 = vmatpush1.msra.mxu0 %v1339
  %1444 = vmatprep.subr.mxu0 0.0
  %1445 = vmatpush1.msra.mxu0 %v1338
  %1446 = vmatprep.subr.mxu0 0.0
  %1447 = vmatpush1.msra.mxu0 %v1337
  %1448 = vmatprep.subr.mxu0 0.0
  %1449 = vmatpush1.msra.mxu0 %v1336
  %1450 = vmatprep.subr.mxu0 0.0
  %1451 = vmatpush1.msra.mxu0 %v1335
  %1452 = vmatprep.subr.mxu0 0.0
  %1453 = vmatpush1.msra.mxu0 %v1334
  %1454 = vmatprep.subr.mxu0 0.0
  %1455 = vmatpush1.msra.mxu0 %v1333
  %1456 = vmatprep.subr.mxu0 0.0
  %1457 = vmatpush1.msra.mxu0 %v1332
  %1458 = vmatprep.subr.mxu0 0.0
  %1459 = vmatpush1.msra.mxu0 %v1331
  %1460 = vmatprep.subr.mxu0 0.0
  %1461 = vmatpush2.msra.mxu0 0.0
  %1462 = vmatprep.subr.mxu0 0.0
  %1463 = vmatpush2.msra.mxu0 0.0
  %1464 = vmatprep.subr.mxu0 0.0
  %1465 = vmatpush2.msra.mxu0 0.0
  %1466 = vmatprep.subr.mxu0 0.0
  %1467 = vmatpush2.msra.mxu0 0.0
  %1468 = vmatprep.subr.mxu0 0.0
  %1469 = vmatpush2.msra.mxu0 0.0
  %1470 = vmatprep.subr.mxu0 0.0
  %1471 = vmatpush2.msra.mxu0 0.0
  %1472 = vmatprep.subr.mxu0 0.0
  %1473 = vmatpush2.msra.mxu0 0.0
  %1474 = vmatprep.subr.mxu0 0.0
  %1475 = vmatpush2.msra.mxu0 0.0
  %1476 = vmatprep.subr.mxu0 0.0
  %1477 = vmatpush2.msra.mxu0 0.0
  %1478 = vmatprep.subr.mxu0 0.0
  %1479 = vmatpush2.msra.mxu0 0.0
  %1480 = vmatprep.subr.mxu0 0.0
  %1481 = vmatpush2.msra.mxu0 0.0
  %1482 = vmatprep.subr.mxu0 0.0
  %1483 = vmatpush2.msra.mxu0 0.0
  %1484 = vmatprep.subr.mxu0 0.0
  %1485 = vmatpush2.msra.mxu0 0.0
  %1486 = vmatprep.subr.mxu0 0.0
  %1487 = vmatpush2.msra.mxu0 0.0
  %1488 = vmatprep.subr.mxu0 0.0
  %1489 = vmatpush2.msra.mxu0 0.0
  %1490 = vmatprep.subr.mxu0 0.0
  %1491 = vmatpush2.msra.mxu0 0.0
  %1492 = vmatprep.mubr.f32.mxu0 0.0
  %1493 = vmatmul.mubr.f32.gmra.mxu0 %v1426
  %v1494 = vpop.f32.mrf.mxu0
  %v1495 = vadd.f32 %v1422, %v1494
  %v1496 = vpop.f32.mrf.mxu0
  %1497 = vdwg.mxu0
  %s1498 = scalar_lea.vmem %s7, 160
  %v1499 = vld [vmem:[%s1498] sm:$0xff]
  %v1500 = vld [vmem:[%s1498 + $0x8] sm:$0xff]
  %v1501 = vld [vmem:[%s1498 + $0x10] sm:$0xff]
  %v1502 = vld [vmem:[%s1498 + $0x18] sm:$0xff]
  %v1503 = vld [vmem:[%s1498 + $0x20] sm:$0xff]
  %v1504 = vld [vmem:[%s1498 + $0x28] sm:$0xff]
  %v1505 = vld [vmem:[%s1498 + $0x30] sm:$0xff]
  %v1506 = vld [vmem:[%s1498 + $0x38] sm:$0xff]
  %v1507 = vld [vmem:[%s1498 + $0x40] sm:$0xff]
  %v1508 = vld [vmem:[%s1498 + $0x48] sm:$0xff]
  %v1510 = vsel %vm522, %v1328, 0
  %1512 = vmatprep.subr.mxu0 0.0
  %1513 = vmatpush1.msra.mxu0 0.0
  %1514 = vmatprep.subr.mxu0 0.0
  %1515 = vmatpush1.msra.mxu0 0.0
  %1516 = vmatprep.subr.mxu0 0.0
  %1517 = vmatpush1.msra.mxu0 0.0
  %1518 = vmatprep.subr.mxu0 0.0
  %1519 = vmatpush1.msra.mxu0 0.0
  %1520 = vmatprep.subr.mxu0 0.0
  %1521 = vmatpush1.msra.mxu0 0.0
  %1522 = vmatprep.subr.mxu0 0.0
  %1523 = vmatpush1.msra.mxu0 0.0
  %1524 = vmatprep.subr.mxu0 0.0
  %1525 = vmatpush1.msra.mxu0 %v1508
  %1526 = vmatprep.subr.mxu0 0.0
  %1527 = vmatpush1.msra.mxu0 %v1507
  %1528 = vmatprep.subr.mxu0 0.0
  %1529 = vmatpush1.msra.mxu0 %v1506
  %1530 = vmatprep.subr.mxu0 0.0
  %1531 = vmatpush1.msra.mxu0 %v1505
  %1532 = vmatprep.subr.mxu0 0.0
  %1533 = vmatpush1.msra.mxu0 %v1504
  %1534 = vmatprep.subr.mxu0 0.0
  %1535 = vmatpush1.msra.mxu0 %v1503
  %1536 = vmatprep.subr.mxu0 0.0
  %1537 = vmatpush1.msra.mxu0 %v1502
  %1538 = vmatprep.subr.mxu0 0.0
  %1539 = vmatpush1.msra.mxu0 %v1501
  %1540 = vmatprep.subr.mxu0 0.0
  %1541 = vmatpush1.msra.mxu0 %v1500
  %1542 = vmatprep.subr.mxu0 0.0
  %1543 = vmatpush1.msra.mxu0 %v1499
  %1544 = vmatprep.subr.mxu0 0.0
  %1545 = vmatpush2.msra.mxu0 0.0
  %1546 = vmatprep.subr.mxu0 0.0
  %1547 = vmatpush2.msra.mxu0 0.0
  %1548 = vmatprep.subr.mxu0 0.0
  %1549 = vmatpush2.msra.mxu0 0.0
  %1550 = vmatprep.subr.mxu0 0.0
  %1551 = vmatpush2.msra.mxu0 0.0
  %1552 = vmatprep.subr.mxu0 0.0
  %1553 = vmatpush2.msra.mxu0 0.0
  %1554 = vmatprep.subr.mxu0 0.0
  %1555 = vmatpush2.msra.mxu0 0.0
  %1556 = vmatprep.subr.mxu0 0.0
  %1557 = vmatpush2.msra.mxu0 0.0
  %1558 = vmatprep.subr.mxu0 0.0
  %1559 = vmatpush2.msra.mxu0 0.0
  %1560 = vmatprep.subr.mxu0 0.0
  %1561 = vmatpush2.msra.mxu0 0.0
  %1562 = vmatprep.subr.mxu0 0.0
  %1563 = vmatpush2.msra.mxu0 0.0
  %1564 = vmatprep.subr.mxu0 0.0
  %1565 = vmatpush2.msra.mxu0 0.0
  %1566 = vmatprep.subr.mxu0 0.0
  %1567 = vmatpush2.msra.mxu0 0.0
  %1568 = vmatprep.subr.mxu0 0.0
  %1569 = vmatpush2.msra.mxu0 0.0
  %1570 = vmatprep.subr.mxu0 0.0
  %1571 = vmatpush2.msra.mxu0 0.0
  %1572 = vmatprep.subr.mxu0 0.0
  %1573 = vmatpush2.msra.mxu0 0.0
  %1574 = vmatprep.subr.mxu0 0.0
  %1575 = vmatpush2.msra.mxu0 0.0
  %1576 = vmatprep.mubr.f32.mxu0 0.0
  %1577 = vmatmul.mubr.f32.gmra.mxu0 %v1510
  %v1578 = vpop.f32.mrf.mxu0
  %v1579 = vadd.f32 0.0, %v1578
  %v1580 = vpop.f32.mrf.mxu0
  %1581 = vdwg.mxu0
  %v1582 = vadd.f32 %v1495, %v1579
  %s1583 = scalar_lea.vmem %s7, 240
  %v1584 = vld [vmem:[%s1583] sm:$0xff]
  %v1585 = vld [vmem:[%s1583 + $0x8] sm:$0xff]
  %v1586 = vld [vmem:[%s1583 + $0x10] sm:$0xff]
  %v1587 = vld [vmem:[%s1583 + $0x18] sm:$0xff]
  %v1588 = vld [vmem:[%s1583 + $0x20] sm:$0xff]
  %v1589 = vld [vmem:[%s1583 + $0x28] sm:$0xff]
  %v1590 = vld [vmem:[%s1583 + $0x30] sm:$0xff]
  %v1591 = vld [vmem:[%s1583 + $0x38] sm:$0xff]
  %v1592 = vld [vmem:[%s1583 + $0x40] sm:$0xff]
  %v1593 = vld [vmem:[%s1583 + $0x48] sm:$0xff]
  %v1595 = vsel %vm522, %v1329, 0
  %1597 = vmatprep.subr.mxu0 0.0
  %1598 = vmatpush1.msra.mxu0 0.0
  %1599 = vmatprep.subr.mxu0 0.0
  %1600 = vmatpush1.msra.mxu0 0.0
  %1601 = vmatprep.subr.mxu0 0.0
  %1602 = vmatpush1.msra.mxu0 0.0
  %1603 = vmatprep.subr.mxu0 0.0
  %1604 = vmatpush1.msra.mxu0 0.0
  %1605 = vmatprep.subr.mxu0 0.0
  %1606 = vmatpush1.msra.mxu0 0.0
  %1607 = vmatprep.subr.mxu0 0.0
  %1608 = vmatpush1.msra.mxu0 0.0
  %1609 = vmatprep.subr.mxu0 0.0
  %1610 = vmatpush1.msra.mxu0 %v1593
  %1611 = vmatprep.subr.mxu0 0.0
  %1612 = vmatpush1.msra.mxu0 %v1592
  %1613 = vmatprep.subr.mxu0 0.0
  %1614 = vmatpush1.msra.mxu0 %v1591
  %1615 = vmatprep.subr.mxu0 0.0
  %1616 = vmatpush1.msra.mxu0 %v1590
  %1617 = vmatprep.subr.mxu0 0.0
  %1618 = vmatpush1.msra.mxu0 %v1589
  %1619 = vmatprep.subr.mxu0 0.0
  %1620 = vmatpush1.msra.mxu0 %v1588
  %1621 = vmatprep.subr.mxu0 0.0
  %1622 = vmatpush1.msra.mxu0 %v1587
  %1623 = vmatprep.subr.mxu0 0.0
  %1624 = vmatpush1.msra.mxu0 %v1586
  %1625 = vmatprep.subr.mxu0 0.0
  %1626 = vmatpush1.msra.mxu0 %v1585
  %1627 = vmatprep.subr.mxu0 0.0
  %1628 = vmatpush1.msra.mxu0 %v1584
  %1629 = vmatprep.subr.mxu0 0.0
  %1630 = vmatpush2.msra.mxu0 0.0
  %1631 = vmatprep.subr.mxu0 0.0
  %1632 = vmatpush2.msra.mxu0 0.0
  %1633 = vmatprep.subr.mxu0 0.0
  %1634 = vmatpush2.msra.mxu0 0.0
  %1635 = vmatprep.subr.mxu0 0.0
  %1636 = vmatpush2.msra.mxu0 0.0
  %1637 = vmatprep.subr.mxu0 0.0
  %1638 = vmatpush2.msra.mxu0 0.0
  %1639 = vmatprep.subr.mxu0 0.0
  %1640 = vmatpush2.msra.mxu0 0.0
  %1641 = vmatprep.subr.mxu0 0.0
  %1642 = vmatpush2.msra.mxu0 0.0
  %1643 = vmatprep.subr.mxu0 0.0
  %1644 = vmatpush2.msra.mxu0 0.0
  %1645 = vmatprep.subr.mxu0 0.0
  %1646 = vmatpush2.msra.mxu0 0.0
  %1647 = vmatprep.subr.mxu0 0.0
  %1648 = vmatpush2.msra.mxu0 0.0
  %1649 = vmatprep.subr.mxu0 0.0
  %1650 = vmatpush2.msra.mxu0 0.0
  %1651 = vmatprep.subr.mxu0 0.0
  %1652 = vmatpush2.msra.mxu0 0.0
  %1653 = vmatprep.subr.mxu0 0.0
  %1654 = vmatpush2.msra.mxu0 0.0
  %1655 = vmatprep.subr.mxu0 0.0
  %1656 = vmatpush2.msra.mxu0 0.0
  %1657 = vmatprep.subr.mxu0 0.0
  %1658 = vmatpush2.msra.mxu0 0.0
  %1659 = vmatprep.subr.mxu0 0.0
  %1660 = vmatpush2.msra.mxu0 0.0
  %1661 = vmatprep.mubr.f32.mxu0 0.0
  %1662 = vmatmul.mubr.f32.gmra.mxu0 %v1595
  %v1663 = vpop.f32.mrf.mxu0
  %v1664 = vadd.f32 0.0, %v1663
  %v1665 = vpop.f32.mrf.mxu0
  %1666 = vdwg.mxu0
  %v1667 = vadd.f32 %v1582, %v1664
  %s1668 = scalar_lea.vmem %s7, 320
  %v1669 = vld [vmem:[%s1668] sm:$0xff]
  %v1670 = vld [vmem:[%s1668 + $0x8] sm:$0xff]
  %v1671 = vld [vmem:[%s1668 + $0x10] sm:$0xff]
  %v1672 = vld [vmem:[%s1668 + $0x18] sm:$0xff]
  %v1673 = vld [vmem:[%s1668 + $0x20] sm:$0xff]
  %v1674 = vld [vmem:[%s1668 + $0x28] sm:$0xff]
  %v1675 = vld [vmem:[%s1668 + $0x30] sm:$0xff]
  %v1676 = vld [vmem:[%s1668 + $0x38] sm:$0xff]
  %v1677 = vld [vmem:[%s1668 + $0x40] sm:$0xff]
  %v1678 = vld [vmem:[%s1668 + $0x48] sm:$0xff]
  %v1680 = vsel %vm522, %v1330, 0
  %1682 = vmatprep.subr.mxu0 0.0
  %1683 = vmatpush1.msra.mxu0 0.0
  %1684 = vmatprep.subr.mxu0 0.0
  %1685 = vmatpush1.msra.mxu0 0.0
  %1686 = vmatprep.subr.mxu0 0.0
  %1687 = vmatpush1.msra.mxu0 0.0
  %1688 = vmatprep.subr.mxu0 0.0
  %1689 = vmatpush1.msra.mxu0 0.0
  %1690 = vmatprep.subr.mxu0 0.0
  %1691 = vmatpush1.msra.mxu0 0.0
  %1692 = vmatprep.subr.mxu0 0.0
  %1693 = vmatpush1.msra.mxu0 0.0
  %1694 = vmatprep.subr.mxu0 0.0
  %1695 = vmatpush1.msra.mxu0 %v1678
  %1696 = vmatprep.subr.mxu0 0.0
  %1697 = vmatpush1.msra.mxu0 %v1677
  %1698 = vmatprep.subr.mxu0 0.0
  %1699 = vmatpush1.msra.mxu0 %v1676
  %1700 = vmatprep.subr.mxu0 0.0
  %1701 = vmatpush1.msra.mxu0 %v1675
  %1702 = vmatprep.subr.mxu0 0.0
  %1703 = vmatpush1.msra.mxu0 %v1674
  %1704 = vmatprep.subr.mxu0 0.0
  %1705 = vmatpush1.msra.mxu0 %v1673
  %1706 = vmatprep.subr.mxu0 0.0
  %1707 = vmatpush1.msra.mxu0 %v1672
  %1708 = vmatprep.subr.mxu0 0.0
  %1709 = vmatpush1.msra.mxu0 %v1671
  %1710 = vmatprep.subr.mxu0 0.0
  %1711 = vmatpush1.msra.mxu0 %v1670
  %1712 = vmatprep.subr.mxu0 0.0
  %1713 = vmatpush1.msra.mxu0 %v1669
  %1714 = vmatprep.subr.mxu0 0.0
  %1715 = vmatpush2.msra.mxu0 0.0
  %1716 = vmatprep.subr.mxu0 0.0
  %1717 = vmatpush2.msra.mxu0 0.0
  %1718 = vmatprep.subr.mxu0 0.0
  %1719 = vmatpush2.msra.mxu0 0.0
  %1720 = vmatprep.subr.mxu0 0.0
  %1721 = vmatpush2.msra.mxu0 0.0
  %1722 = vmatprep.subr.mxu0 0.0
  %1723 = vmatpush2.msra.mxu0 0.0
  %1724 = vmatprep.subr.mxu0 0.0
  %1725 = vmatpush2.msra.mxu0 0.0
  %1726 = vmatprep.subr.mxu0 0.0
  %1727 = vmatpush2.msra.mxu0 0.0
  %1728 = vmatprep.subr.mxu0 0.0
  %1729 = vmatpush2.msra.mxu0 0.0
  %1730 = vmatprep.subr.mxu0 0.0
  %1731 = vmatpush2.msra.mxu0 0.0
  %1732 = vmatprep.subr.mxu0 0.0
  %1733 = vmatpush2.msra.mxu0 0.0
  %1734 = vmatprep.subr.mxu0 0.0
  %1735 = vmatpush2.msra.mxu0 0.0
  %1736 = vmatprep.subr.mxu0 0.0
  %1737 = vmatpush2.msra.mxu0 0.0
  %1738 = vmatprep.subr.mxu0 0.0
  %1739 = vmatpush2.msra.mxu0 0.0
  %1740 = vmatprep.subr.mxu0 0.0
  %1741 = vmatpush2.msra.mxu0 0.0
  %1742 = vmatprep.subr.mxu0 0.0
  %1743 = vmatpush2.msra.mxu0 0.0
  %1744 = vmatprep.subr.mxu0 0.0
  %1745 = vmatpush2.msra.mxu0 0.0
  %1746 = vmatprep.mubr.f32.mxu0 0.0
  %1747 = vmatmul.mubr.f32.gmra.mxu0 %v1680
  %v1748 = vpop.f32.mrf.mxu0
  %v1749 = vadd.f32 0.0, %v1748
  %v1750 = vpop.f32.mrf.mxu0
  %1751 = vdwg.mxu0
  %v1752 = vadd.f32 %v1667, %v1749
  %v1753 = vmul.f32 %v1752, %v376
  %v1754 = vrot.slane %v1753, 4
  %v1755 = vadd.f32 %v1753, %v1754
  %v1756 = vrot.slane %v1755, 2
  %v1757 = vadd.f32 %v1755, %v1756
  %v1758 = vrot.slane %v1757, 1
  %v1759 = vadd.f32 %v1757, %v1758
  %v1760 = vrcp.pop 2.0
  %v1761 = vmul.f32 %v1759, %v1760
  %v1762 = vsub.f32 %v1752, %v1761
  %v1763 = vmul.f32 %v1762, %v376
  %v1764 = vmul.f32 %v1763, %v1763
  %v1765 = vrot.slane %v1764, 4
  %v1766 = vadd.f32 %v1764, %v1765
  %v1767 = vrot.slane %v1766, 2
  %v1768 = vadd.f32 %v1766, %v1767
  %v1769 = vrot.slane %v1768, 1
  %v1770 = vadd.f32 %v1768, %v1769
  %v1771 = vmul.f32 %v1770, %v1760
  %v1772 = vadd.f32 %v1771, 1e-05
  %v1773 = vrsqrt.pop %v1772
  %v1774 = vmul.f32 %v1762, %v1773
  %v1775 = vld [vmem:[%s8] sm:$0x1]
  %v1777 = vlaneseq
  %v1778 = vshrl.u32 %v1777, 7
  %v1779 = vsub.s32 0, %v1778
  %v1780 = vrot.slane %v1775, %v1779
  %v1782 = vmul.f32 %v1774, %v1780
  %v1783 = vld [vmem:[%s9] sm:$0x1]
  %v1785 = vlaneseq
  %v1786 = vshrl.u32 %v1785, 7
  %v1787 = vsub.s32 0, %v1786
  %v1788 = vrot.slane %v1783, %v1787
  %v1790 = vadd.f32 %v1782, %v1788
  %v1791 = vmax.f32 %v1790, 0.0
  %v1792 = vld [vmem:[%s10] sm:$0xff]
  %v1793 = vld [vmem:[%s10 + $0x8] sm:$0xff]
  %v1794 = vld [vmem:[%s10 + $0x10] sm:$0xff]
  %v1795 = vld [vmem:[%s10 + $0x18] sm:$0xff]
  %v1796 = vld [vmem:[%s10 + $0x20] sm:$0xff]
  %v1797 = vld [vmem:[%s10 + $0x28] sm:$0xff]
  %v1798 = vld [vmem:[%s10 + $0x30] sm:$0xff]
  %v1799 = vld [vmem:[%s10 + $0x38] sm:$0xff]
  %v1800 = vld [vmem:[%s10 + $0x40] sm:$0xff]
  %v1801 = vld [vmem:[%s10 + $0x48] sm:$0xff]
  %v1802 = vld [vmem:[%s10 + $0x50] sm:$0xff]
  %v1803 = vld [vmem:[%s10 + $0x58] sm:$0xff]
  %v1804 = vld [vmem:[%s10 + $0x60] sm:$0xff]
  %v1805 = vld [vmem:[%s10 + $0x68] sm:$0xff]
  %v1806 = vld [vmem:[%s10 + $0x70] sm:$0xff]
  %v1807 = vld [vmem:[%s10 + $0x78] sm:$0xff]
  %v1808 = vld [vmem:[%s11] sm:$0x1]
  %v1810 = vlaneseq
  %v1811 = vshrl.u32 %v1810, 7
  %v1812 = vsub.s32 0, %v1811
  %v1813 = vrot.slane %v1808, %v1812
  %1815 = vmatprep.subr.mxu0 0.0
  %1816 = vmatpush1.msra.mxu0 %v1807
  %1817 = vmatprep.subr.mxu0 0.0
  %1818 = vmatpush1.msra.mxu0 %v1806
  %1819 = vmatprep.subr.mxu0 0.0
  %1820 = vmatpush1.msra.mxu0 %v1805
  %1821 = vmatprep.subr.mxu0 0.0
  %1822 = vmatpush1.msra.mxu0 %v1804
  %1823 = vmatprep.subr.mxu0 0.0
  %1824 = vmatpush1.msra.mxu0 %v1803
  %1825 = vmatprep.subr.mxu0 0.0
  %1826 = vmatpush1.msra.mxu0 %v1802
  %1827 = vmatprep.subr.mxu0 0.0
  %1828 = vmatpush1.msra.mxu0 %v1801
  %1829 = vmatprep.subr.mxu0 0.0
  %1830 = vmatpush1.msra.mxu0 %v1800
  %1831 = vmatprep.subr.mxu0 0.0
  %1832 = vmatpush1.msra.mxu0 %v1799
  %1833 = vmatprep.subr.mxu0 0.0
  %1834 = vmatpush1.msra.mxu0 %v1798
  %1835 = vmatprep.subr.mxu0 0.0
  %1836 = vmatpush1.msra.mxu0 %v1797
  %1837 = vmatprep.subr.mxu0 0.0
  %1838 = vmatpush1.msra.mxu0 %v1796
  %1839 = vmatprep.subr.mxu0 0.0
  %1840 = vmatpush1.msra.mxu0 %v1795
  %1841 = vmatprep.subr.mxu0 0.0
  %1842 = vmatpush1.msra.mxu0 %v1794
  %1843 = vmatprep.subr.mxu0 0.0
  %1844 = vmatpush1.msra.mxu0 %v1793
  %1845 = vmatprep.subr.mxu0 0.0
  %1846 = vmatpush1.msra.mxu0 %v1792
  %1847 = vmatprep.subr.mxu0 0.0
  %1848 = vmatpush2.msra.mxu0 0.0
  %1849 = vmatprep.subr.mxu0 0.0
  %1850 = vmatpush2.msra.mxu0 0.0
  %1851 = vmatprep.subr.mxu0 0.0
  %1852 = vmatpush2.msra.mxu0 0.0
  %1853 = vmatprep.subr.mxu0 0.0
  %1854 = vmatpush2.msra.mxu0 0.0
  %1855 = vmatprep.subr.mxu0 0.0
  %1856 = vmatpush2.msra.mxu0 0.0
  %1857 = vmatprep.subr.mxu0 0.0
  %1858 = vmatpush2.msra.mxu0 0.0
  %1859 = vmatprep.subr.mxu0 0.0
  %1860 = vmatpush2.msra.mxu0 0.0
  %1861 = vmatprep.subr.mxu0 0.0
  %1862 = vmatpush2.msra.mxu0 0.0
  %1863 = vmatprep.subr.mxu0 0.0
  %1864 = vmatpush2.msra.mxu0 0.0
  %1865 = vmatprep.subr.mxu0 0.0
  %1866 = vmatpush2.msra.mxu0 0.0
  %1867 = vmatprep.subr.mxu0 0.0
  %1868 = vmatpush2.msra.mxu0 0.0
  %1869 = vmatprep.subr.mxu0 0.0
  %1870 = vmatpush2.msra.mxu0 0.0
  %1871 = vmatprep.subr.mxu0 0.0
  %1872 = vmatpush2.msra.mxu0 0.0
  %1873 = vmatprep.subr.mxu0 0.0
  %1874 = vmatpush2.msra.mxu0 0.0
  %1875 = vmatprep.subr.mxu0 0.0
  %1876 = vmatpush2.msra.mxu0 0.0
  %1877 = vmatprep.subr.mxu0 0.0
  %1878 = vmatpush2.msra.mxu0 0.0
  %1879 = vmatprep.mubr.f32.mxu0 0.0
  %1880 = vmatmul.mubr.f32.gmra.mxu0 %v1791
  %v1881 = vpop.f32.mrf.mxu0
  %v1882 = vadd.f32 %v1813, %v1881
  %v1883 = vpop.f32.mrf.mxu0
  %1884 = vdwg.mxu0
  %v1885 = vlaneseq
  %v1886 = vand.u32 %v1885, 127
  %vm1887 = vcmp.eq.s32.totalorder %v1886, 0
  %v1888 = vsub.f32 0.0, %v1882
  %v1889 = vmul.f32 %v1888, 1.442695
  %v1890 = vpow.pop %v1889
  %v1891 = vadd.f32 %v1890, 1.0
  %v1892 = vrcp.pop %v1891
  %v1893 = vmul.f32 1.0, %v1892
  %v1894 = vsel %vm1887, %v1893, %v1882
  %1895 = vst [vmem:[%s12] sm:$0xff] %v1894
  // Predicated region
  $region50: #{infodiscriminator_forward.1} parent=0 // pred_check
    _
  $region51: #{infodiscriminator_forward.1} parent=0 // pred_check_branch
    %1897 = sbr.rel (0) target = $region53
  $region52: #{infodiscriminator_forward.1} parent=0 // pred_region
    _
  $region53: #{infodiscriminator_forward.1} parent=0 // pred_fallthru
    _
  // Predicated region
  $region54: #{infodiscriminator_forward.1} parent=0 // pred_check
    _
  $region55: #{infodiscriminator_forward.1} parent=0 // pred_check_branch
    %1899 = sbr.rel (0) target = $region57
  $region56: #{infodiscriminator_forward.1} parent=0 // pred_region
    _
  $region57: #{infodiscriminator_forward.1} parent=0 // pred_fallthru
    _

</llo_original>
